<compile_context>
chip_gen: v7x
topology: tpu7x:2x2x1
jax: 0.10.0
libtpu: 0.0.40
codegen_flags: <defaults>
</compile_context>

<pallas_src>
import math

import jax
import jax.numpy as jnp
from jax.experimental import pallas as pl
from jax.experimental.pallas import tpu as pltpu

# ----- small, module-consistent shapes ---------------------------------------
BATCH = 16
FFN_INPUTS = 512          # ffn_inputs
FFN_HIDDENS = 1024        # ffn_hiddens (module default)
FFN_OUTPUTS = 256         # ffn_outputs (module default)


# ----------------------------- Pallas kernel ---------------------------------
def ffn_kernel(x_ref, w1_ref, b1_ref, w2_ref, b2_ref, out_ref):
    """Fused FFN in a single pass (no hidden-dim tiling).

    x_ref : (TB, IN)    bf16  (batch tile; already cast in the wrapper)
    w1_ref: (IN, H)     bf16  (dense1 weight, pre-transposed, resident)
    b1_ref: (1, H)      f32
    w2_ref: (H, OUT)    bf16  (dense2 weight, pre-transposed, resident)
    b2_ref: (1, OUT)    f32
    out_ref:(TB, OUT)   f32
    """
    # dense1: (TB, IN) @ (IN, H) on the MXU, f32 accumulation.
    h = jnp.dot(x_ref[...], w1_ref[...], preferred_element_type=jnp.float32)
    # bias + ReLU in f32 on the VPU (v5e has no bf16 VALU).
    h = jnp.maximum(h + b1_ref[...], 0.0)
    # dense2: (TB, H) @ (H, OUT) on the MXU, f32 accumulation, + bias.
    out_ref[...] = (
        jnp.dot(h.astype(jnp.bfloat16), w2_ref[...],
                preferred_element_type=jnp.float32)
        + b2_ref[...]
    )


# ----------------------------- wrapper ----------------------------------------
def _pick_batch_tile(B):
    """Large batches get 128/256-row tiles (parallel grid axis, keeps the MXU
    rows fed and lets v7x use both TensorCores); small batches are one tile."""
    for t in (256, 128):
        if B % t == 0 and B > t:
            return t
    return B


def ffn_forward(x, packed):
    """Forward pass. Accepts any leading dims (like nn.Linear); they are
    flattened into the batch so the weight fetch is amortized."""
    w1, b1, w2, b2 = packed
    IN, H = w1.shape
    OUT = w2.shape[1]
    assert x.shape[-1] == IN, (x.shape, IN)

    lead = x.shape[:-1]
    x2 = x.reshape(-1, IN).astype(jnp.bfloat16)   # cast once, halves x traffic
    B = x2.shape[0]
    tb = _pick_batch_tile(B)
    grid = (B // tb,)

    flops = 2 * B * (IN * H + H * OUT)
    bytes_accessed = (
        x2.size * 2                      # x (bf16)
        + w1.size * 2 + w2.size * 2      # weights (bf16)
        + b1.size * 4 + b2.size * 4      # biases (f32)
        + B * OUT * 4                    # output (f32)
    )

    out = pl.pallas_call(
        ffn_kernel,
        out_shape=jax.ShapeDtypeStruct((B, OUT), jnp.float32),
        grid=grid,
        in_specs=[
            pl.BlockSpec((tb, IN), lambda i: (i, 0)),   # x batch tile
            pl.BlockSpec((IN, H), lambda i: (0, 0)),    # W1 (resident)
            pl.BlockSpec((1, H), lambda i: (0, 0)),     # b1 (resident)
            pl.BlockSpec((H, OUT), lambda i: (0, 0)),   # W2 (resident)
            pl.BlockSpec((1, OUT), lambda i: (0, 0)),   # b2 (resident)
        ],
        out_specs=pl.BlockSpec((tb, OUT), lambda i: (i, 0)),
        compiler_params=pltpu.CompilerParams(
            dimension_semantics=("parallel",)),
        cost_estimate=pl.CostEstimate(
            flops=flops, transcendentals=0, bytes_accessed=bytes_accessed),
    )(x2, w1, b1, w2, b2)

    return out.reshape(*lead, OUT)


# ----------------------------- parameters ------------------------------------
def init_params(key):
    """PyTorch-style (out_features, in_features) f32 parameters."""
    k1, k2, k3, k4 = jax.random.split(key, 4)

    def linear(kw, kb, fan_in, fan_out):
        bound = 1.0 / math.sqrt(fan_in)
        w = jax.random.uniform(kw, (fan_out, fan_in), jnp.float32, -bound, bound)
        b = jax.random.uniform(kb, (fan_out,), jnp.float32, -bound, bound)
        return w, b

    w1, b1 = linear(k1, k2, FFN_INPUTS, FFN_HIDDENS)
    w2, b2 = linear(k3, k4, FFN_HIDDENS, FFN_OUTPUTS)
    return dict(w1=w1, b1=b1, w2=w2, b2=b2)


def pack_params(p):
    """Done ONCE at init: transpose to (in, out), cast weights to bf16,
    reshape biases to (1, n) rows."""
    return (
        p['w1'].T.astype(jnp.bfloat16),
        p['b1'].reshape(1, -1).astype(jnp.float32),
        p['w2'].T.astype(jnp.bfloat16),
        p['b2'].reshape(1, -1).astype(jnp.float32),
    )


# ----------------------------- references ------------------------------------
def reference_f32(x, p):
    """Pure-f32 mirror of the PyTorch module (semantic check, loose tol)."""
    h = jnp.maximum(x @ p['w1'].T + p['b1'], 0.0)
    return h @ p['w2'].T + p['b2']


def reference_bf16(x, packed):
    """Pure-JAX mirror of the kernel's exact numerics (tight tol)."""
    w1, b1, w2, b2 = packed
    h = jnp.dot(x.astype(jnp.bfloat16), w1,
                preferred_element_type=jnp.float32) + b1
    h = jnp.maximum(h, 0.0)
    return jnp.dot(h.astype(jnp.bfloat16), w2,
                   preferred_element_type=jnp.float32) + b2


# ----------------------------- main -------------------------------------------
if __name__ == "__main__":
    key = jax.random.PRNGKey(0)
    k_x, k_p = jax.random.split(key)

    x = jax.random.normal(k_x, (BATCH, FFN_INPUTS), jnp.float32)
    params = init_params(k_p)
    packed = pack_params(params)          # hoisted out of the forward path

    out = jax.block_until_ready(ffn_forward(x, packed))
    assert out.shape == (BATCH, FFN_OUTPUTS), out.shape
    assert bool(jnp.all(jnp.isfinite(out)))

    # Tight check against the bf16-weight reference (same numerics as kernel).
    ref_tight = jax.block_until_ready(reference_bf16(x, packed))
    err_tight = float(jnp.max(jnp.abs(out - ref_tight)))
    assert err_tight < 1e-3, err_tight

    # Loose semantic check against the full-f32 PyTorch-equivalent forward
    # (difference is only the deliberate bf16 weight/operand quantization).
    ref_f32 = jax.block_until_ready(reference_f32(x, params))
    err_f32 = float(jnp.max(jnp.abs(out - ref_f32)))
    assert err_f32 < 5e-2, err_f32

    print("KERNEL_OK")
</pallas_src>

<mosaic_0001>
module attributes {stable_mosaic.version = 11 : i64} {
  func.func @ffn_kernel(%arg0: i32, %arg1: memref<16x512xbf16, #tpu.memory_space<vmem>>, %arg2: memref<512x1024xbf16, #tpu.memory_space<vmem>>, %arg3: memref<1x1024xf32, #tpu.memory_space<vmem>>, %arg4: memref<1024x256xbf16, #tpu.memory_space<vmem>>, %arg5: memref<1x256xf32, #tpu.memory_space<vmem>>, %arg6: memref<16x256xf32, #tpu.memory_space<vmem>>) attributes {dimension_semantics = [#tpu.dimension_semantics<parallel>], iteration_bounds = array<i64: 1>, scalar_prefetch = 0 : i64, scratch_operands = 0 : i64, tpu.core_type = #tpu.core_type<tc>, window_params = [{transform_indices = @transform_0, window_bounds = array<i64: 16, 512>}, {pipeline_mode = #tpu.pipeline_mode<synchronous>, transform_indices = @transform_1, window_bounds = array<i64: 512, 1024>}, {pipeline_mode = #tpu.pipeline_mode<synchronous>, transform_indices = @transform_2, window_bounds = array<i64: 1, 1024>}, {pipeline_mode = #tpu.pipeline_mode<synchronous>, transform_indices = @transform_3, window_bounds = array<i64: 1024, 256>}, {pipeline_mode = #tpu.pipeline_mode<synchronous>, transform_indices = @transform_4, window_bounds = array<i64: 1, 256>}, {transform_indices = @transform_5, window_bounds = array<i64: 16, 256>}]} {
    %c0 = arith.constant 0 : index
    %c0_0 = arith.constant 0 : index
    %0 = vector.load %arg1[%c0, %c0_0] : memref<16x512xbf16, #tpu.memory_space<vmem>>, vector<16x512xbf16>
    %c0_1 = arith.constant 0 : index
    %c0_2 = arith.constant 0 : index
    %1 = vector.load %arg2[%c0_1, %c0_2] : memref<512x1024xbf16, #tpu.memory_space<vmem>>, vector<512x1024xbf16>
    %cst = arith.constant dense<0.000000e+00> : vector<16x1024xf32>
    %2 = tpu.matmul %0, %1, %cst {dimension_numbers = #tpu.dot_dimension_numbers<[1], [0], [0], [1], [0, 0, 1, 1], [], []>} : vector<16x512xbf16>, vector<512x1024xbf16>, vector<16x1024xf32> -> vector<16x1024xf32>
    %c0_3 = arith.constant 0 : index
    %c0_4 = arith.constant 0 : index
    %3 = vector.load %arg3[%c0_3, %c0_4] : memref<1x1024xf32, #tpu.memory_space<vmem>>, vector<1x1024xf32>
    %4 = vector.broadcast %3 : vector<1x1024xf32> to vector<16x1024xf32>
    %5 = arith.addf %2, %4 : vector<16x1024xf32>
    %cst_5 = arith.constant 0.000000e+00 : f32
    %6 = vector.broadcast %cst_5 : f32 to vector<16x1024xf32>
    %7 = arith.maximumf %5, %6 : vector<16x1024xf32>
    %8 = arith.truncf %7 : vector<16x1024xf32> to vector<16x1024xbf16>
    %c0_6 = arith.constant 0 : index
    %c0_7 = arith.constant 0 : index
    %9 = vector.load %arg4[%c0_6, %c0_7] : memref<1024x256xbf16, #tpu.memory_space<vmem>>, vector<1024x256xbf16>
    %cst_8 = arith.constant dense<0.000000e+00> : vector<16x256xf32>
    %10 = tpu.matmul %8, %9, %cst_8 {dimension_numbers = #tpu.dot_dimension_numbers<[1], [0], [0], [1], [0, 0, 1, 1], [], []>} : vector<16x1024xbf16>, vector<1024x256xbf16>, vector<16x256xf32> -> vector<16x256xf32>
    %c0_9 = arith.constant 0 : index
    %c0_10 = arith.constant 0 : index
    %11 = vector.load %arg5[%c0_9, %c0_10] : memref<1x256xf32, #tpu.memory_space<vmem>>, vector<1x256xf32>
    %12 = vector.broadcast %11 : vector<1x256xf32> to vector<16x256xf32>
    %13 = arith.addf %10, %12 : vector<16x256xf32>
    %c0_11 = arith.constant 0 : index
    %c0_12 = arith.constant 0 : index
    %14 = vector.load %arg6[%c0_11, %c0_12] : memref<16x256xf32, #tpu.memory_space<vmem>>, vector<16x256xf32>
    tpu.vector_store %arg6[%c0_11, %c0_12], %13 {strides = array<i32>} : memref<16x256xf32, #tpu.memory_space<vmem>>, vector<16x256xf32>,
    return
  }
  func.func @transform_0(%arg0: i32) -> (i32, i32) {
    %c0_i32 = arith.constant 0 : i32
    %c0_i32_0 = arith.constant 0 : i32
    return %arg0, %c0_i32 : i32, i32
  }
  func.func @transform_1(%arg0: i32) -> (i32, i32) {
    %c0_i32 = arith.constant 0 : i32
    %c0_i32_0 = arith.constant 0 : i32
    %c0_i32_1 = arith.constant 0 : i32
    return %c0_i32, %c0_i32_0 : i32, i32
  }
  func.func @transform_2(%arg0: i32) -> (i32, i32) {
    %c0_i32 = arith.constant 0 : i32
    %c0_i32_0 = arith.constant 0 : i32
    %c0_i32_1 = arith.constant 0 : i32
    return %c0_i32, %c0_i32_0 : i32, i32
  }
  func.func @transform_3(%arg0: i32) -> (i32, i32) {
    %c0_i32 = arith.constant 0 : i32
    %c0_i32_0 = arith.constant 0 : i32
    %c0_i32_1 = arith.constant 0 : i32
    return %c0_i32, %c0_i32_0 : i32, i32
  }
  func.func @transform_4(%arg0: i32) -> (i32, i32) {
    %c0_i32 = arith.constant 0 : i32
    %c0_i32_0 = arith.constant 0 : i32
    %c0_i32_1 = arith.constant 0 : i32
    return %c0_i32, %c0_i32_0 : i32, i32
  }
  func.func @transform_5(%arg0: i32) -> (i32, i32) {
    %c0_i32 = arith.constant 0 : i32
    %c0_i32_0 = arith.constant 0 : i32
    return %arg0, %c0_i32 : i32, i32
  }
}

</mosaic_0001>

<llo_original>
// kernel: tpu_custom_call.1
$region0: #{tpu_custom_call.1}
  #allocation0 [shape = 'u32[]', space=smem, size = 0x4, offset = 0x4, fixed_abs, tag = 'smem constant byte address 0x4 - core index']
  #allocation1 [shape = 'u32[144,128]{1,0:T(1,128)}', space=vmem, size = 0x12000, scoped, tag = 'internal scratch']
  %s0 = inlined_call_operand.hbm [shape: bf16[16,512], index: 0, kind: input, shape index: {}]
  %s1 = inlined_call_operand.hbm [shape: bf16[512,1024], index: 1, kind: input, shape index: {}]
  %s2 = inlined_call_operand.hbm [shape: f32[1,1024], index: 2, kind: input, shape index: {}]
  %s3 = inlined_call_operand.hbm [shape: bf16[1024,256], index: 3, kind: input, shape index: {}]
  %s4 = inlined_call_operand.vmem [shape: f32[1,256], index: 4, kind: input, shape index: {}]
  %s5 = inlined_call_operand.hbm [shape: f32[16,256], index: 5, kind: output, shape index: {}]
  %s6 = sld [smem:[#allocation0]]
  $region46: #{tpu_custom_call.1} parent=0
    _
  %s8 = ssub.s32 1, %s6
  %s9 = scalar_select 0, %s8, %s6
  $region1: #{tpu_custom_call.1} parent=0
    #allocation2 [shape = 'u8[16384]{0}', space=vmem, size = 0x4000, scoped, tag = 'input window, operand 0, single buffered']
    #allocation3 [shape = 's32[1]{0}', space=sflag, size = 0x4, scoped, tag = 'scoped memory for tpu_custom_call.1']
    #allocation4 [shape = 's32[1]{0}', space=sflag, size = 0x4, scoped, tag = 'scoped memory for tpu_custom_call.1']
    #allocation5 [shape = 'u8[1048576]{0}', space=vmem, size = 0x100000, scoped, tag = 'input window, operand 1, single buffered']
    #allocation6 [shape = 's32[1]{0}', space=sflag, size = 0x4, scoped, tag = 'scoped memory for tpu_custom_call.1']
    #allocation7 [shape = 'u8[4096]{0}', space=vmem, size = 0x1000, scoped, tag = 'input window, operand 2, single buffered']
    #allocation8 [shape = 'u8[524288]{0}', space=vmem, size = 0x80000, scoped, tag = 'input window, operand 3, single buffered']
    #allocation9 [shape = 's32[1]{0}', space=sflag, size = 0x4, scoped, tag = 'scoped memory for tpu_custom_call.1']
    #allocation10 [shape = 'u8[16384]{0}', space=vmem, size = 0x4000, scoped, tag = 'output window, operand 0, single buffered']
    %10 = vsyncpa [#allocation3], 0
    %11 = vsyncpa [#allocation6], 0
    %12 = vsyncpa [#allocation9], 0
    %13 = vsyncpa [#allocation4], 0
    // Predicated region
    $region2: #{tpu_custom_call.1} parent=1 // pred_check
      _
    $region3: #{tpu_custom_call.1} parent=1 // pred_check_branch
      %15 = sbr.rel (0) target = $region5
    $region4: #{tpu_custom_call.1} parent=1 // pred_region
      %s17 = ssub.s32 512, 512
      %18 = vsyncadd [#allocation3], %s17
      %s19 = sshll.u32 [#allocation2], 4
      %s20 = int_to_ptr.vmem [resolvable:$true] %s19
      %25 = dma.hbm_to_vmem [thread:$0]  %s0, 512, %s20, [#allocation3], 256, 256, 16
    $region5: #{tpu_custom_call.1} parent=1 // pred_fallthru
      _
    // Predicated region
    $region6: #{tpu_custom_call.1} parent=1 // pred_check
      _
    $region7: #{tpu_custom_call.1} parent=1 // pred_check_branch
      %27 = sbr.rel (0) target = $region9
    $region8: #{tpu_custom_call.1} parent=1 // pred_region
      %s29 = ssub.s32 32768, 32768
      %30 = vsyncadd [#allocation6], %s29
      %s31 = sshll.u32 [#allocation5], 4
      %s32 = int_to_ptr.vmem [resolvable:$true] %s31
      %37 = dma.hbm_to_vmem [thread:$0]  %s1, 32768, %s32, [#allocation6], 512, 512, 32
    $region9: #{tpu_custom_call.1} parent=1 // pred_fallthru
      _
    // Predicated region
    $region10: #{tpu_custom_call.1} parent=1 // pred_check
      _
    $region11: #{tpu_custom_call.1} parent=1 // pred_check_branch
      %39 = sbr.rel (0) target = $region13
    $region12: #{tpu_custom_call.1} parent=1 // pred_region
      %s41 = ssub.s32 128, 128
      %42 = vsyncadd [#allocation6], %s41
      %s44 = sshll.u32 [#allocation7], 4
      %s45 = int_to_ptr.vmem [resolvable:$true] %s44
      %47 = dma.hbm_to_vmem [thread:$0]  %s2, 128, %s45, [#allocation6]
    $region13: #{tpu_custom_call.1} parent=1 // pred_fallthru
      _
    // Predicated region
    $region14: #{tpu_custom_call.1} parent=1 // pred_check
      _
    $region15: #{tpu_custom_call.1} parent=1 // pred_check_branch
      %49 = sbr.rel (0) target = $region17
    $region16: #{tpu_custom_call.1} parent=1 // pred_region
      %s51 = ssub.s32 16384, 16384
      %52 = vsyncadd [#allocation9], %s51
      %s53 = sshll.u32 [#allocation8], 4
      %s54 = int_to_ptr.vmem [resolvable:$true] %s53
      %59 = dma.hbm_to_vmem [thread:$0]  %s3, 16384, %s54, [#allocation9], 128, 128, 8
    $region17: #{tpu_custom_call.1} parent=1 // pred_fallthru
      _
    // Predicated region
    $region18: #{tpu_custom_call.1} parent=1 // pred_check
      _
    $region19: #{tpu_custom_call.1} parent=1 // pred_check_branch
      %61 = sbr.rel (0) target = $region21
    $region20: #{tpu_custom_call.1} parent=1 // pred_region
      _
    $region21: #{tpu_custom_call.1} parent=1 // pred_fallthru
      _
    // Predicated region
    $region22: #{tpu_custom_call.1} parent=1 // pred_check
      _
    $region23: #{tpu_custom_call.1} parent=1 // pred_check_branch
      %63 = sbr.rel (0) target = $region25
    $region24: #{tpu_custom_call.1} parent=1 // pred_region
      %64 = dma.done [#allocation3], 512
    $region25: #{tpu_custom_call.1} parent=1 // pred_fallthru
      _
    // Predicated region
    $region26: #{tpu_custom_call.1} parent=1 // pred_check
      _
    $region27: #{tpu_custom_call.1} parent=1 // pred_check_branch
      %66 = sbr.rel (0) target = $region29
    $region28: #{tpu_custom_call.1} parent=1 // pred_region
      %67 = dma.done [#allocation6], 32768
    $region29: #{tpu_custom_call.1} parent=1 // pred_fallthru
      _
    // Predicated region
    $region30: #{tpu_custom_call.1} parent=1 // pred_check
      _
    $region31: #{tpu_custom_call.1} parent=1 // pred_check_branch
      %69 = sbr.rel (0) target = $region33
    $region32: #{tpu_custom_call.1} parent=1 // pred_region
      %70 = dma.done [#allocation6], 128
    $region33: #{tpu_custom_call.1} parent=1 // pred_fallthru
      _
    // Predicated region
    $region34: #{tpu_custom_call.1} parent=1 // pred_check
      _
    $region35: #{tpu_custom_call.1} parent=1 // pred_check_branch
      %72 = sbr.rel (0) target = $region37
    $region36: #{tpu_custom_call.1} parent=1 // pred_region
      %73 = dma.done [#allocation9], 16384
    $region37: #{tpu_custom_call.1} parent=1 // pred_fallthru
      _
    %v74 = vld [vmem:[#allocation2] sm:$0xff]
    %v75 = vld [vmem:[#allocation2 + $0x8] sm:$0xff]
    %v76 = vld [vmem:[#allocation2 + $0x10] sm:$0xff]
    %v77 = vld [vmem:[#allocation2 + $0x18] sm:$0xff]
    %v78 = vld [vmem:[#allocation5] sm:$0xff]
    %v79 = vld [vmem:[#allocation5 + $0x8] sm:$0xff]
    %v80 = vld [vmem:[#allocation5 + $0x10] sm:$0xff]
    %v81 = vld [vmem:[#allocation5 + $0x18] sm:$0xff]
    %v82 = vld [vmem:[#allocation5 + $0x20] sm:$0xff]
    %v83 = vld [vmem:[#allocation5 + $0x28] sm:$0xff]
    %v84 = vld [vmem:[#allocation5 + $0x30] sm:$0xff]
    %v85 = vld [vmem:[#allocation5 + $0x38] sm:$0xff]
    %v86 = vld [vmem:[#allocation5 + $0x40] sm:$0xff]
    %v87 = vld [vmem:[#allocation5 + $0x48] sm:$0xff]
    %v88 = vld [vmem:[#allocation5 + $0x50] sm:$0xff]
    %v89 = vld [vmem:[#allocation5 + $0x58] sm:$0xff]
    %v90 = vld [vmem:[#allocation5 + $0x60] sm:$0xff]
    %v91 = vld [vmem:[#allocation5 + $0x68] sm:$0xff]
    %v92 = vld [vmem:[#allocation5 + $0x70] sm:$0xff]
    %v93 = vld [vmem:[#allocation5 + $0x78] sm:$0xff]
    %v94 = vld [vmem:[#allocation5 + $0x80] sm:$0xff]
    %v95 = vld [vmem:[#allocation5 + $0x88] sm:$0xff]
    %v96 = vld [vmem:[#allocation5 + $0x90] sm:$0xff]
    %v97 = vld [vmem:[#allocation5 + $0x98] sm:$0xff]
    %v98 = vld [vmem:[#allocation5 + $0xa0] sm:$0xff]
    %v99 = vld [vmem:[#allocation5 + $0xa8] sm:$0xff]
    %v100 = vld [vmem:[#allocation5 + $0xb0] sm:$0xff]
    %v101 = vld [vmem:[#allocation5 + $0xb8] sm:$0xff]
    %v102 = vld [vmem:[#allocation5 + $0xc0] sm:$0xff]
    %v103 = vld [vmem:[#allocation5 + $0xc8] sm:$0xff]
    %v104 = vld [vmem:[#allocation5 + $0xd0] sm:$0xff]
    %v105 = vld [vmem:[#allocation5 + $0xd8] sm:$0xff]
    %v106 = vld [vmem:[#allocation5 + $0xe0] sm:$0xff]
    %v107 = vld [vmem:[#allocation5 + $0xe8] sm:$0xff]
    %v108 = vld [vmem:[#allocation5 + $0xf0] sm:$0xff]
    %v109 = vld [vmem:[#allocation5 + $0xf8] sm:$0xff]
    %v110 = vld [vmem:[#allocation5 + $0x100] sm:$0xff]
    %v111 = vld [vmem:[#allocation5 + $0x108] sm:$0xff]
    %v112 = vld [vmem:[#allocation5 + $0x110] sm:$0xff]
    %v113 = vld [vmem:[#allocation5 + $0x118] sm:$0xff]
    %v114 = vld [vmem:[#allocation5 + $0x120] sm:$0xff]
    %v115 = vld [vmem:[#allocation5 + $0x128] sm:$0xff]
    %v116 = vld [vmem:[#allocation5 + $0x130] sm:$0xff]
    %v117 = vld [vmem:[#allocation5 + $0x138] sm:$0xff]
    %v118 = vld [vmem:[#allocation5 + $0x140] sm:$0xff]
    %v119 = vld [vmem:[#allocation5 + $0x148] sm:$0xff]
    %v120 = vld [vmem:[#allocation5 + $0x150] sm:$0xff]
    %v121 = vld [vmem:[#allocation5 + $0x158] sm:$0xff]
    %v122 = vld [vmem:[#allocation5 + $0x160] sm:$0xff]
    %v123 = vld [vmem:[#allocation5 + $0x168] sm:$0xff]
    %v124 = vld [vmem:[#allocation5 + $0x170] sm:$0xff]
    %v125 = vld [vmem:[#allocation5 + $0x178] sm:$0xff]
    %v126 = vld [vmem:[#allocation5 + $0x180] sm:$0xff]
    %v127 = vld [vmem:[#allocation5 + $0x188] sm:$0xff]
    %v128 = vld [vmem:[#allocation5 + $0x190] sm:$0xff]
    %v129 = vld [vmem:[#allocation5 + $0x198] sm:$0xff]
    %v130 = vld [vmem:[#allocation5 + $0x1a0] sm:$0xff]
    %v131 = vld [vmem:[#allocation5 + $0x1a8] sm:$0xff]
    %v132 = vld [vmem:[#allocation5 + $0x1b0] sm:$0xff]
    %v133 = vld [vmem:[#allocation5 + $0x1b8] sm:$0xff]
    %v134 = vld [vmem:[#allocation5 + $0x1c0] sm:$0xff]
    %v135 = vld [vmem:[#allocation5 + $0x1c8] sm:$0xff]
    %v136 = vld [vmem:[#allocation5 + $0x1d0] sm:$0xff]
    %v137 = vld [vmem:[#allocation5 + $0x1d8] sm:$0xff]
    %v138 = vld [vmem:[#allocation5 + $0x1e0] sm:$0xff]
    %v139 = vld [vmem:[#allocation5 + $0x1e8] sm:$0xff]
    %v140 = vld [vmem:[#allocation5 + $0x1f0] sm:$0xff]
    %v141 = vld [vmem:[#allocation5 + $0x1f8] sm:$0xff]
    %v142 = vld [vmem:[#allocation5 + $0x200] sm:$0xff]
    %v143 = vld [vmem:[#allocation5 + $0x208] sm:$0xff]
    %v144 = vld [vmem:[#allocation5 + $0x210] sm:$0xff]
    %v145 = vld [vmem:[#allocation5 + $0x218] sm:$0xff]
    %v146 = vld [vmem:[#allocation5 + $0x220] sm:$0xff]
    %v147 = vld [vmem:[#allocation5 + $0x228] sm:$0xff]
    %v148 = vld [vmem:[#allocation5 + $0x230] sm:$0xff]
    %v149 = vld [vmem:[#allocation5 + $0x238] sm:$0xff]
    %v150 = vld [vmem:[#allocation5 + $0x240] sm:$0xff]
    %v151 = vld [vmem:[#allocation5 + $0x248] sm:$0xff]
    %v152 = vld [vmem:[#allocation5 + $0x250] sm:$0xff]
    %v153 = vld [vmem:[#allocation5 + $0x258] sm:$0xff]
    %v154 = vld [vmem:[#allocation5 + $0x260] sm:$0xff]
    %v155 = vld [vmem:[#allocation5 + $0x268] sm:$0xff]
    %v156 = vld [vmem:[#allocation5 + $0x270] sm:$0xff]
    %v157 = vld [vmem:[#allocation5 + $0x278] sm:$0xff]
    %v158 = vld [vmem:[#allocation5 + $0x280] sm:$0xff]
    %v159 = vld [vmem:[#allocation5 + $0x288] sm:$0xff]
    %v160 = vld [vmem:[#allocation5 + $0x290] sm:$0xff]
    %v161 = vld [vmem:[#allocation5 + $0x298] sm:$0xff]
    %v162 = vld [vmem:[#allocation5 + $0x2a0] sm:$0xff]
    %v163 = vld [vmem:[#allocation5 + $0x2a8] sm:$0xff]
    %v164 = vld [vmem:[#allocation5 + $0x2b0] sm:$0xff]
    %v165 = vld [vmem:[#allocation5 + $0x2b8] sm:$0xff]
    %v166 = vld [vmem:[#allocation5 + $0x2c0] sm:$0xff]
    %v167 = vld [vmem:[#allocation5 + $0x2c8] sm:$0xff]
    %v168 = vld [vmem:[#allocation5 + $0x2d0] sm:$0xff]
    %v169 = vld [vmem:[#allocation5 + $0x2d8] sm:$0xff]
    %v170 = vld [vmem:[#allocation5 + $0x2e0] sm:$0xff]
    %v171 = vld [vmem:[#allocation5 + $0x2e8] sm:$0xff]
    %v172 = vld [vmem:[#allocation5 + $0x2f0] sm:$0xff]
    %v173 = vld [vmem:[#allocation5 + $0x2f8] sm:$0xff]
    %v174 = vld [vmem:[#allocation5 + $0x300] sm:$0xff]
    %v175 = vld [vmem:[#allocation5 + $0x308] sm:$0xff]
    %v176 = vld [vmem:[#allocation5 + $0x310] sm:$0xff]
    %v177 = vld [vmem:[#allocation5 + $0x318] sm:$0xff]
    %v178 = vld [vmem:[#allocation5 + $0x320] sm:$0xff]
    %v179 = vld [vmem:[#allocation5 + $0x328] sm:$0xff]
    %v180 = vld [vmem:[#allocation5 + $0x330] sm:$0xff]
    %v181 = vld [vmem:[#allocation5 + $0x338] sm:$0xff]
    %v182 = vld [vmem:[#allocation5 + $0x340] sm:$0xff]
    %v183 = vld [vmem:[#allocation5 + $0x348] sm:$0xff]
    %v184 = vld [vmem:[#allocation5 + $0x350] sm:$0xff]
    %v185 = vld [vmem:[#allocation5 + $0x358] sm:$0xff]
    %v186 = vld [vmem:[#allocation5 + $0x360] sm:$0xff]
    %v187 = vld [vmem:[#allocation5 + $0x368] sm:$0xff]
    %v188 = vld [vmem:[#allocation5 + $0x370] sm:$0xff]
    %v189 = vld [vmem:[#allocation5 + $0x378] sm:$0xff]
    %v190 = vld [vmem:[#allocation5 + $0x380] sm:$0xff]
    %v191 = vld [vmem:[#allocation5 + $0x388] sm:$0xff]
    %v192 = vld [vmem:[#allocation5 + $0x390] sm:$0xff]
    %v193 = vld [vmem:[#allocation5 + $0x398] sm:$0xff]
    %v194 = vld [vmem:[#allocation5 + $0x3a0] sm:$0xff]
    %v195 = vld [vmem:[#allocation5 + $0x3a8] sm:$0xff]
    %v196 = vld [vmem:[#allocation5 + $0x3b0] sm:$0xff]
    %v197 = vld [vmem:[#allocation5 + $0x3b8] sm:$0xff]
    %v198 = vld [vmem:[#allocation5 + $0x3c0] sm:$0xff]
    %v199 = vld [vmem:[#allocation5 + $0x3c8] sm:$0xff]
    %v200 = vld [vmem:[#allocation5 + $0x3d0] sm:$0xff]
    %v201 = vld [vmem:[#allocation5 + $0x3d8] sm:$0xff]
    %v202 = vld [vmem:[#allocation5 + $0x3e0] sm:$0xff]
    %v203 = vld [vmem:[#allocation5 + $0x3e8] sm:$0xff]
    %v204 = vld [vmem:[#allocation5 + $0x3f0] sm:$0xff]
    %v205 = vld [vmem:[#allocation5 + $0x3f8] sm:$0xff]
    %v206 = vld [vmem:[#allocation5 + $0x400] sm:$0xff]
    %v207 = vld [vmem:[#allocation5 + $0x408] sm:$0xff]
    %v208 = vld [vmem:[#allocation5 + $0x410] sm:$0xff]
    %v209 = vld [vmem:[#allocation5 + $0x418] sm:$0xff]
    %v210 = vld [vmem:[#allocation5 + $0x420] sm:$0xff]
    %v211 = vld [vmem:[#allocation5 + $0x428] sm:$0xff]
    %v212 = vld [vmem:[#allocation5 + $0x430] sm:$0xff]
    %v213 = vld [vmem:[#allocation5 + $0x438] sm:$0xff]
    %v214 = vld [vmem:[#allocation5 + $0x440] sm:$0xff]
    %v215 = vld [vmem:[#allocation5 + $0x448] sm:$0xff]
    %v216 = vld [vmem:[#allocation5 + $0x450] sm:$0xff]
    %v217 = vld [vmem:[#allocation5 + $0x458] sm:$0xff]
    %v218 = vld [vmem:[#allocation5 + $0x460] sm:$0xff]
    %v219 = vld [vmem:[#allocation5 + $0x468] sm:$0xff]
    %v220 = vld [vmem:[#allocation5 + $0x470] sm:$0xff]
    %v221 = vld [vmem:[#allocation5 + $0x478] sm:$0xff]
    %v222 = vld [vmem:[#allocation5 + $0x480] sm:$0xff]
    %v223 = vld [vmem:[#allocation5 + $0x488] sm:$0xff]
    %v224 = vld [vmem:[#allocation5 + $0x490] sm:$0xff]
    %v225 = vld [vmem:[#allocation5 + $0x498] sm:$0xff]
    %v226 = vld [vmem:[#allocation5 + $0x4a0] sm:$0xff]
    %v227 = vld [vmem:[#allocation5 + $0x4a8] sm:$0xff]
    %v228 = vld [vmem:[#allocation5 + $0x4b0] sm:$0xff]
    %v229 = vld [vmem:[#allocation5 + $0x4b8] sm:$0xff]
    %v230 = vld [vmem:[#allocation5 + $0x4c0] sm:$0xff]
    %v231 = vld [vmem:[#allocation5 + $0x4c8] sm:$0xff]
    %v232 = vld [vmem:[#allocation5 + $0x4d0] sm:$0xff]
    %v233 = vld [vmem:[#allocation5 + $0x4d8] sm:$0xff]
    %v234 = vld [vmem:[#allocation5 + $0x4e0] sm:$0xff]
    %v235 = vld [vmem:[#allocation5 + $0x4e8] sm:$0xff]
    %v236 = vld [vmem:[#allocation5 + $0x4f0] sm:$0xff]
    %v237 = vld [vmem:[#allocation5 + $0x4f8] sm:$0xff]
    %v238 = vld [vmem:[#allocation5 + $0x500] sm:$0xff]
    %v239 = vld [vmem:[#allocation5 + $0x508] sm:$0xff]
    %v240 = vld [vmem:[#allocation5 + $0x510] sm:$0xff]
    %v241 = vld [vmem:[#allocation5 + $0x518] sm:$0xff]
    %v242 = vld [vmem:[#allocation5 + $0x520] sm:$0xff]
    %v243 = vld [vmem:[#allocation5 + $0x528] sm:$0xff]
    %v244 = vld [vmem:[#allocation5 + $0x530] sm:$0xff]
    %v245 = vld [vmem:[#allocation5 + $0x538] sm:$0xff]
    %v246 = vld [vmem:[#allocation5 + $0x540] sm:$0xff]
    %v247 = vld [vmem:[#allocation5 + $0x548] sm:$0xff]
    %v248 = vld [vmem:[#allocation5 + $0x550] sm:$0xff]
    %v249 = vld [vmem:[#allocation5 + $0x558] sm:$0xff]
    %v250 = vld [vmem:[#allocation5 + $0x560] sm:$0xff]
    %v251 = vld [vmem:[#allocation5 + $0x568] sm:$0xff]
    %v252 = vld [vmem:[#allocation5 + $0x570] sm:$0xff]
    %v253 = vld [vmem:[#allocation5 + $0x578] sm:$0xff]
    %v254 = vld [vmem:[#allocation5 + $0x580] sm:$0xff]
    %v255 = vld [vmem:[#allocation5 + $0x588] sm:$0xff]
    %v256 = vld [vmem:[#allocation5 + $0x590] sm:$0xff]
    %v257 = vld [vmem:[#allocation5 + $0x598] sm:$0xff]
    %v258 = vld [vmem:[#allocation5 + $0x5a0] sm:$0xff]
    %v259 = vld [vmem:[#allocation5 + $0x5a8] sm:$0xff]
    %v260 = vld [vmem:[#allocation5 + $0x5b0] sm:$0xff]
    %v261 = vld [vmem:[#allocation5 + $0x5b8] sm:$0xff]
    %v262 = vld [vmem:[#allocation5 + $0x5c0] sm:$0xff]
    %v263 = vld [vmem:[#allocation5 + $0x5c8] sm:$0xff]
    %v264 = vld [vmem:[#allocation5 + $0x5d0] sm:$0xff]
    %v265 = vld [vmem:[#allocation5 + $0x5d8] sm:$0xff]
    %v266 = vld [vmem:[#allocation5 + $0x5e0] sm:$0xff]
    %v267 = vld [vmem:[#allocation5 + $0x5e8] sm:$0xff]
    %v268 = vld [vmem:[#allocation5 + $0x5f0] sm:$0xff]
    %v269 = vld [vmem:[#allocation5 + $0x5f8] sm:$0xff]
    %v270 = vld [vmem:[#allocation5 + $0x600] sm:$0xff]
    %v271 = vld [vmem:[#allocation5 + $0x608] sm:$0xff]
    %v272 = vld [vmem:[#allocation5 + $0x610] sm:$0xff]
    %v273 = vld [vmem:[#allocation5 + $0x618] sm:$0xff]
    %v274 = vld [vmem:[#allocation5 + $0x620] sm:$0xff]
    %v275 = vld [vmem:[#allocation5 + $0x628] sm:$0xff]
    %v276 = vld [vmem:[#allocation5 + $0x630] sm:$0xff]
    %v277 = vld [vmem:[#allocation5 + $0x638] sm:$0xff]
    %v278 = vld [vmem:[#allocation5 + $0x640] sm:$0xff]
    %v279 = vld [vmem:[#allocation5 + $0x648] sm:$0xff]
    %v280 = vld [vmem:[#allocation5 + $0x650] sm:$0xff]
    %v281 = vld [vmem:[#allocation5 + $0x658] sm:$0xff]
    %v282 = vld [vmem:[#allocation5 + $0x660] sm:$0xff]
    %v283 = vld [vmem:[#allocation5 + $0x668] sm:$0xff]
    %v284 = vld [vmem:[#allocation5 + $0x670] sm:$0xff]
    %v285 = vld [vmem:[#allocation5 + $0x678] sm:$0xff]
    %v286 = vld [vmem:[#allocation5 + $0x680] sm:$0xff]
    %v287 = vld [vmem:[#allocation5 + $0x688] sm:$0xff]
    %v288 = vld [vmem:[#allocation5 + $0x690] sm:$0xff]
    %v289 = vld [vmem:[#allocation5 + $0x698] sm:$0xff]
    %v290 = vld [vmem:[#allocation5 + $0x6a0] sm:$0xff]
    %v291 = vld [vmem:[#allocation5 + $0x6a8] sm:$0xff]
    %v292 = vld [vmem:[#allocation5 + $0x6b0] sm:$0xff]
    %v293 = vld [vmem:[#allocation5 + $0x6b8] sm:$0xff]
    %v294 = vld [vmem:[#allocation5 + $0x6c0] sm:$0xff]
    %v295 = vld [vmem:[#allocation5 + $0x6c8] sm:$0xff]
    %v296 = vld [vmem:[#allocation5 + $0x6d0] sm:$0xff]
    %v297 = vld [vmem:[#allocation5 + $0x6d8] sm:$0xff]
    %v298 = vld [vmem:[#allocation5 + $0x6e0] sm:$0xff]
    %v299 = vld [vmem:[#allocation5 + $0x6e8] sm:$0xff]
    %v300 = vld [vmem:[#allocation5 + $0x6f0] sm:$0xff]
    %v301 = vld [vmem:[#allocation5 + $0x6f8] sm:$0xff]
    %v302 = vld [vmem:[#allocation5 + $0x700] sm:$0xff]
    %v303 = vld [vmem:[#allocation5 + $0x708] sm:$0xff]
    %v304 = vld [vmem:[#allocation5 + $0x710] sm:$0xff]
    %v305 = vld [vmem:[#allocation5 + $0x718] sm:$0xff]
    %v306 = vld [vmem:[#allocation5 + $0x720] sm:$0xff]
    %v307 = vld [vmem:[#allocation5 + $0x728] sm:$0xff]
    %v308 = vld [vmem:[#allocation5 + $0x730] sm:$0xff]
    %v309 = vld [vmem:[#allocation5 + $0x738] sm:$0xff]
    %v310 = vld [vmem:[#allocation5 + $0x740] sm:$0xff]
    %v311 = vld [vmem:[#allocation5 + $0x748] sm:$0xff]
    %v312 = vld [vmem:[#allocation5 + $0x750] sm:$0xff]
    %v313 = vld [vmem:[#allocation5 + $0x758] sm:$0xff]
    %v314 = vld [vmem:[#allocation5 + $0x760] sm:$0xff]
    %v315 = vld [vmem:[#allocation5 + $0x768] sm:$0xff]
    %v316 = vld [vmem:[#allocation5 + $0x770] sm:$0xff]
    %v317 = vld [vmem:[#allocation5 + $0x778] sm:$0xff]
    %v318 = vld [vmem:[#allocation5 + $0x780] sm:$0xff]
    %v319 = vld [vmem:[#allocation5 + $0x788] sm:$0xff]
    %v320 = vld [vmem:[#allocation5 + $0x790] sm:$0xff]
    %v321 = vld [vmem:[#allocation5 + $0x798] sm:$0xff]
    %v322 = vld [vmem:[#allocation5 + $0x7a0] sm:$0xff]
    %v323 = vld [vmem:[#allocation5 + $0x7a8] sm:$0xff]
    %v324 = vld [vmem:[#allocation5 + $0x7b0] sm:$0xff]
    %v325 = vld [vmem:[#allocation5 + $0x7b8] sm:$0xff]
    %v326 = vld [vmem:[#allocation5 + $0x7c0] sm:$0xff]
    %v327 = vld [vmem:[#allocation5 + $0x7c8] sm:$0xff]
    %v328 = vld [vmem:[#allocation5 + $0x7d0] sm:$0xff]
    %v329 = vld [vmem:[#allocation5 + $0x7d8] sm:$0xff]
    %v330 = vld [vmem:[#allocation5 + $0x7e0] sm:$0xff]
    %v331 = vld [vmem:[#allocation5 + $0x7e8] sm:$0xff]
    %v332 = vld [vmem:[#allocation5 + $0x7f0] sm:$0xff]
    %v333 = vld [vmem:[#allocation5 + $0x7f8] sm:$0xff]
    %v334 = vld [vmem:[#allocation7] sm:$0xff]
    %v336 = vlaneseq
    %v337 = vshrl.u32 %v336, 7
    %v338 = vsub.s32 0, %v337
    %v339 = vrot.slane %v334, %v338
    %v340 = vlaneseq
    %v341 = vshrl.u32 %v340, 7
    %v342 = vsub.s32 1, %v341
    %v343 = vrot.slane %v334, %v342
    %v344 = vlaneseq
    %v345 = vshrl.u32 %v344, 7
    %v346 = vsub.s32 2, %v345
    %v347 = vrot.slane %v334, %v346
    %v348 = vlaneseq
    %v349 = vshrl.u32 %v348, 7
    %v350 = vsub.s32 3, %v349
    %v351 = vrot.slane %v334, %v350
    %v352 = vlaneseq
    %v353 = vshrl.u32 %v352, 7
    %v354 = vsub.s32 4, %v353
    %v355 = vrot.slane %v334, %v354
    %v356 = vlaneseq
    %v357 = vshrl.u32 %v356, 7
    %v358 = vsub.s32 5, %v357
    %v359 = vrot.slane %v334, %v358
    %v360 = vlaneseq
    %v361 = vshrl.u32 %v360, 7
    %v362 = vsub.s32 6, %v361
    %v363 = vrot.slane %v334, %v362
    %v364 = vlaneseq
    %v365 = vshrl.u32 %v364, 7
    %v366 = vsub.s32 7, %v365
    %v367 = vrot.slane %v334, %v366
    %v380 = vunpack.c.l.b16 %v74
    %v381 = vunpack.c.h.b16 %v74
    %v382 = vunpack.c.l.b16 %v75
    %v383 = vunpack.c.h.b16 %v75
    %v384 = vunpack.c.l.b16 %v76
    %v385 = vunpack.c.h.b16 %v76
    %v386 = vunpack.c.l.b16 %v77
    %v387 = vunpack.c.h.b16 %v77
    %v388 = vpack.c.b16 %v384, %v380
    %v389 = vpack.c.b16 %v385, %v381
    %v390 = vpack.c.b16 %v386, %v382
    %v391 = vpack.c.b16 %v387, %v383
    %v652 = vunpack.c.l.b16 %v78
    %v653 = vunpack.c.h.b16 %v78
    %v654 = vunpack.c.l.b16 %v79
    %v655 = vunpack.c.h.b16 %v79
    %v656 = vunpack.c.l.b16 %v80
    %v657 = vunpack.c.h.b16 %v80
    %v658 = vunpack.c.l.b16 %v81
    %v659 = vunpack.c.h.b16 %v81
    %v660 = vunpack.c.l.b16 %v82
    %v661 = vunpack.c.h.b16 %v82
    %v662 = vunpack.c.l.b16 %v83
    %v663 = vunpack.c.h.b16 %v83
    %v664 = vunpack.c.l.b16 %v84
    %v665 = vunpack.c.h.b16 %v84
    %v666 = vunpack.c.l.b16 %v85
    %v667 = vunpack.c.h.b16 %v85
    %v668 = vunpack.c.l.b16 %v86
    %v669 = vunpack.c.h.b16 %v86
    %v670 = vunpack.c.l.b16 %v87
    %v671 = vunpack.c.h.b16 %v87
    %v672 = vunpack.c.l.b16 %v88
    %v673 = vunpack.c.h.b16 %v88
    %v674 = vunpack.c.l.b16 %v89
    %v675 = vunpack.c.h.b16 %v89
    %v676 = vunpack.c.l.b16 %v90
    %v677 = vunpack.c.h.b16 %v90
    %v678 = vunpack.c.l.b16 %v91
    %v679 = vunpack.c.h.b16 %v91
    %v680 = vunpack.c.l.b16 %v92
    %v681 = vunpack.c.h.b16 %v92
    %v682 = vunpack.c.l.b16 %v93
    %v683 = vunpack.c.h.b16 %v93
    %v684 = vunpack.c.l.b16 %v94
    %v685 = vunpack.c.h.b16 %v94
    %v686 = vunpack.c.l.b16 %v95
    %v687 = vunpack.c.h.b16 %v95
    %v688 = vunpack.c.l.b16 %v96
    %v689 = vunpack.c.h.b16 %v96
    %v690 = vunpack.c.l.b16 %v97
    %v691 = vunpack.c.h.b16 %v97
    %v692 = vunpack.c.l.b16 %v98
    %v693 = vunpack.c.h.b16 %v98
    %v694 = vunpack.c.l.b16 %v99
    %v695 = vunpack.c.h.b16 %v99
    %v696 = vunpack.c.l.b16 %v100
    %v697 = vunpack.c.h.b16 %v100
    %v698 = vunpack.c.l.b16 %v101
    %v699 = vunpack.c.h.b16 %v101
    %v700 = vunpack.c.l.b16 %v102
    %v701 = vunpack.c.h.b16 %v102
    %v702 = vunpack.c.l.b16 %v103
    %v703 = vunpack.c.h.b16 %v103
    %v704 = vunpack.c.l.b16 %v104
    %v705 = vunpack.c.h.b16 %v104
    %v706 = vunpack.c.l.b16 %v105
    %v707 = vunpack.c.h.b16 %v105
    %v708 = vunpack.c.l.b16 %v106
    %v709 = vunpack.c.h.b16 %v106
    %v710 = vunpack.c.l.b16 %v107
    %v711 = vunpack.c.h.b16 %v107
    %v712 = vunpack.c.l.b16 %v108
    %v713 = vunpack.c.h.b16 %v108
    %v714 = vunpack.c.l.b16 %v109
    %v715 = vunpack.c.h.b16 %v109
    %v716 = vunpack.c.l.b16 %v110
    %v717 = vunpack.c.h.b16 %v110
    %v718 = vunpack.c.l.b16 %v111
    %v719 = vunpack.c.h.b16 %v111
    %v720 = vunpack.c.l.b16 %v112
    %v721 = vunpack.c.h.b16 %v112
    %v722 = vunpack.c.l.b16 %v113
    %v723 = vunpack.c.h.b16 %v113
    %v724 = vunpack.c.l.b16 %v114
    %v725 = vunpack.c.h.b16 %v114
    %v726 = vunpack.c.l.b16 %v115
    %v727 = vunpack.c.h.b16 %v115
    %v728 = vunpack.c.l.b16 %v116
    %v729 = vunpack.c.h.b16 %v116
    %v730 = vunpack.c.l.b16 %v117
    %v731 = vunpack.c.h.b16 %v117
    %v732 = vunpack.c.l.b16 %v118
    %v733 = vunpack.c.h.b16 %v118
    %v734 = vunpack.c.l.b16 %v119
    %v735 = vunpack.c.h.b16 %v119
    %v736 = vunpack.c.l.b16 %v120
    %v737 = vunpack.c.h.b16 %v120
    %v738 = vunpack.c.l.b16 %v121
    %v739 = vunpack.c.h.b16 %v121
    %v740 = vunpack.c.l.b16 %v122
    %v741 = vunpack.c.h.b16 %v122
    %v742 = vunpack.c.l.b16 %v123
    %v743 = vunpack.c.h.b16 %v123
    %v744 = vunpack.c.l.b16 %v124
    %v745 = vunpack.c.h.b16 %v124
    %v746 = vunpack.c.l.b16 %v125
    %v747 = vunpack.c.h.b16 %v125
    %v748 = vunpack.c.l.b16 %v126
    %v749 = vunpack.c.h.b16 %v126
    %v750 = vunpack.c.l.b16 %v127
    %v751 = vunpack.c.h.b16 %v127
    %v752 = vunpack.c.l.b16 %v128
    %v753 = vunpack.c.h.b16 %v128
    %v754 = vunpack.c.l.b16 %v129
    %v755 = vunpack.c.h.b16 %v129
    %v756 = vunpack.c.l.b16 %v130
    %v757 = vunpack.c.h.b16 %v130
    %v758 = vunpack.c.l.b16 %v131
    %v759 = vunpack.c.h.b16 %v131
    %v760 = vunpack.c.l.b16 %v132
    %v761 = vunpack.c.h.b16 %v132
    %v762 = vunpack.c.l.b16 %v133
    %v763 = vunpack.c.h.b16 %v133
    %v764 = vunpack.c.l.b16 %v134
    %v765 = vunpack.c.h.b16 %v134
    %v766 = vunpack.c.l.b16 %v135
    %v767 = vunpack.c.h.b16 %v135
    %v768 = vunpack.c.l.b16 %v136
    %v769 = vunpack.c.h.b16 %v136
    %v770 = vunpack.c.l.b16 %v137
    %v771 = vunpack.c.h.b16 %v137
    %v772 = vunpack.c.l.b16 %v138
    %v773 = vunpack.c.h.b16 %v138
    %v774 = vunpack.c.l.b16 %v139
    %v775 = vunpack.c.h.b16 %v139
    %v776 = vunpack.c.l.b16 %v140
    %v777 = vunpack.c.h.b16 %v140
    %v778 = vunpack.c.l.b16 %v141
    %v779 = vunpack.c.h.b16 %v141
    %v780 = vunpack.c.l.b16 %v142
    %v781 = vunpack.c.h.b16 %v142
    %v782 = vunpack.c.l.b16 %v143
    %v783 = vunpack.c.h.b16 %v143
    %v784 = vunpack.c.l.b16 %v144
    %v785 = vunpack.c.h.b16 %v144
    %v786 = vunpack.c.l.b16 %v145
    %v787 = vunpack.c.h.b16 %v145
    %v788 = vunpack.c.l.b16 %v146
    %v789 = vunpack.c.h.b16 %v146
    %v790 = vunpack.c.l.b16 %v147
    %v791 = vunpack.c.h.b16 %v147
    %v792 = vunpack.c.l.b16 %v148
    %v793 = vunpack.c.h.b16 %v148
    %v794 = vunpack.c.l.b16 %v149
    %v795 = vunpack.c.h.b16 %v149
    %v796 = vunpack.c.l.b16 %v150
    %v797 = vunpack.c.h.b16 %v150
    %v798 = vunpack.c.l.b16 %v151
    %v799 = vunpack.c.h.b16 %v151
    %v800 = vunpack.c.l.b16 %v152
    %v801 = vunpack.c.h.b16 %v152
    %v802 = vunpack.c.l.b16 %v153
    %v803 = vunpack.c.h.b16 %v153
    %v804 = vunpack.c.l.b16 %v154
    %v805 = vunpack.c.h.b16 %v154
    %v806 = vunpack.c.l.b16 %v155
    %v807 = vunpack.c.h.b16 %v155
    %v808 = vunpack.c.l.b16 %v156
    %v809 = vunpack.c.h.b16 %v156
    %v810 = vunpack.c.l.b16 %v157
    %v811 = vunpack.c.h.b16 %v157
    %v812 = vunpack.c.l.b16 %v158
    %v813 = vunpack.c.h.b16 %v158
    %v814 = vunpack.c.l.b16 %v159
    %v815 = vunpack.c.h.b16 %v159
    %v816 = vunpack.c.l.b16 %v160
    %v817 = vunpack.c.h.b16 %v160
    %v818 = vunpack.c.l.b16 %v161
    %v819 = vunpack.c.h.b16 %v161
    %v820 = vunpack.c.l.b16 %v162
    %v821 = vunpack.c.h.b16 %v162
    %v822 = vunpack.c.l.b16 %v163
    %v823 = vunpack.c.h.b16 %v163
    %v824 = vunpack.c.l.b16 %v164
    %v825 = vunpack.c.h.b16 %v164
    %v826 = vunpack.c.l.b16 %v165
    %v827 = vunpack.c.h.b16 %v165
    %v828 = vunpack.c.l.b16 %v166
    %v829 = vunpack.c.h.b16 %v166
    %v830 = vunpack.c.l.b16 %v167
    %v831 = vunpack.c.h.b16 %v167
    %v832 = vunpack.c.l.b16 %v168
    %v833 = vunpack.c.h.b16 %v168
    %v834 = vunpack.c.l.b16 %v169
    %v835 = vunpack.c.h.b16 %v169
    %v836 = vunpack.c.l.b16 %v170
    %v837 = vunpack.c.h.b16 %v170
    %v838 = vunpack.c.l.b16 %v171
    %v839 = vunpack.c.h.b16 %v171
    %v840 = vunpack.c.l.b16 %v172
    %v841 = vunpack.c.h.b16 %v172
    %v842 = vunpack.c.l.b16 %v173
    %v843 = vunpack.c.h.b16 %v173
    %v844 = vunpack.c.l.b16 %v174
    %v845 = vunpack.c.h.b16 %v174
    %v846 = vunpack.c.l.b16 %v175
    %v847 = vunpack.c.h.b16 %v175
    %v848 = vunpack.c.l.b16 %v176
    %v849 = vunpack.c.h.b16 %v176
    %v850 = vunpack.c.l.b16 %v177
    %v851 = vunpack.c.h.b16 %v177
    %v852 = vunpack.c.l.b16 %v178
    %v853 = vunpack.c.h.b16 %v178
    %v854 = vunpack.c.l.b16 %v179
    %v855 = vunpack.c.h.b16 %v179
    %v856 = vunpack.c.l.b16 %v180
    %v857 = vunpack.c.h.b16 %v180
    %v858 = vunpack.c.l.b16 %v181
    %v859 = vunpack.c.h.b16 %v181
    %v860 = vunpack.c.l.b16 %v182
    %v861 = vunpack.c.h.b16 %v182
    %v862 = vunpack.c.l.b16 %v183
    %v863 = vunpack.c.h.b16 %v183
    %v864 = vunpack.c.l.b16 %v184
    %v865 = vunpack.c.h.b16 %v184
    %v866 = vunpack.c.l.b16 %v185
    %v867 = vunpack.c.h.b16 %v185
    %v868 = vunpack.c.l.b16 %v186
    %v869 = vunpack.c.h.b16 %v186
    %v870 = vunpack.c.l.b16 %v187
    %v871 = vunpack.c.h.b16 %v187
    %v872 = vunpack.c.l.b16 %v188
    %v873 = vunpack.c.h.b16 %v188
    %v874 = vunpack.c.l.b16 %v189
    %v875 = vunpack.c.h.b16 %v189
    %v876 = vunpack.c.l.b16 %v190
    %v877 = vunpack.c.h.b16 %v190
    %v878 = vunpack.c.l.b16 %v191
    %v879 = vunpack.c.h.b16 %v191
    %v880 = vunpack.c.l.b16 %v192
    %v881 = vunpack.c.h.b16 %v192
    %v882 = vunpack.c.l.b16 %v193
    %v883 = vunpack.c.h.b16 %v193
    %v884 = vunpack.c.l.b16 %v194
    %v885 = vunpack.c.h.b16 %v194
    %v886 = vunpack.c.l.b16 %v195
    %v887 = vunpack.c.h.b16 %v195
    %v888 = vunpack.c.l.b16 %v196
    %v889 = vunpack.c.h.b16 %v196
    %v890 = vunpack.c.l.b16 %v197
    %v891 = vunpack.c.h.b16 %v197
    %v892 = vunpack.c.l.b16 %v198
    %v893 = vunpack.c.h.b16 %v198
    %v894 = vunpack.c.l.b16 %v199
    %v895 = vunpack.c.h.b16 %v199
    %v896 = vunpack.c.l.b16 %v200
    %v897 = vunpack.c.h.b16 %v200
    %v898 = vunpack.c.l.b16 %v201
    %v899 = vunpack.c.h.b16 %v201
    %v900 = vunpack.c.l.b16 %v202
    %v901 = vunpack.c.h.b16 %v202
    %v902 = vunpack.c.l.b16 %v203
    %v903 = vunpack.c.h.b16 %v203
    %v904 = vunpack.c.l.b16 %v204
    %v905 = vunpack.c.h.b16 %v204
    %v906 = vunpack.c.l.b16 %v205
    %v907 = vunpack.c.h.b16 %v205
    %v908 = vunpack.c.l.b16 %v206
    %v909 = vunpack.c.h.b16 %v206
    %v910 = vunpack.c.l.b16 %v207
    %v911 = vunpack.c.h.b16 %v207
    %v912 = vunpack.c.l.b16 %v208
    %v913 = vunpack.c.h.b16 %v208
    %v914 = vunpack.c.l.b16 %v209
    %v915 = vunpack.c.h.b16 %v209
    %v916 = vunpack.c.l.b16 %v210
    %v917 = vunpack.c.h.b16 %v210
    %v918 = vunpack.c.l.b16 %v211
    %v919 = vunpack.c.h.b16 %v211
    %v920 = vunpack.c.l.b16 %v212
    %v921 = vunpack.c.h.b16 %v212
    %v922 = vunpack.c.l.b16 %v213
    %v923 = vunpack.c.h.b16 %v213
    %v924 = vunpack.c.l.b16 %v214
    %v925 = vunpack.c.h.b16 %v214
    %v926 = vunpack.c.l.b16 %v215
    %v927 = vunpack.c.h.b16 %v215
    %v928 = vunpack.c.l.b16 %v216
    %v929 = vunpack.c.h.b16 %v216
    %v930 = vunpack.c.l.b16 %v217
    %v931 = vunpack.c.h.b16 %v217
    %v932 = vunpack.c.l.b16 %v218
    %v933 = vunpack.c.h.b16 %v218
    %v934 = vunpack.c.l.b16 %v219
    %v935 = vunpack.c.h.b16 %v219
    %v936 = vunpack.c.l.b16 %v220
    %v937 = vunpack.c.h.b16 %v220
    %v938 = vunpack.c.l.b16 %v221
    %v939 = vunpack.c.h.b16 %v221
    %v940 = vunpack.c.l.b16 %v222
    %v941 = vunpack.c.h.b16 %v222
    %v942 = vunpack.c.l.b16 %v223
    %v943 = vunpack.c.h.b16 %v223
    %v944 = vunpack.c.l.b16 %v224
    %v945 = vunpack.c.h.b16 %v224
    %v946 = vunpack.c.l.b16 %v225
    %v947 = vunpack.c.h.b16 %v225
    %v948 = vunpack.c.l.b16 %v226
    %v949 = vunpack.c.h.b16 %v226
    %v950 = vunpack.c.l.b16 %v227
    %v951 = vunpack.c.h.b16 %v227
    %v952 = vunpack.c.l.b16 %v228
    %v953 = vunpack.c.h.b16 %v228
    %v954 = vunpack.c.l.b16 %v229
    %v955 = vunpack.c.h.b16 %v229
    %v956 = vunpack.c.l.b16 %v230
    %v957 = vunpack.c.h.b16 %v230
    %v958 = vunpack.c.l.b16 %v231
    %v959 = vunpack.c.h.b16 %v231
    %v960 = vunpack.c.l.b16 %v232
    %v961 = vunpack.c.h.b16 %v232
    %v962 = vunpack.c.l.b16 %v233
    %v963 = vunpack.c.h.b16 %v233
    %v964 = vunpack.c.l.b16 %v234
    %v965 = vunpack.c.h.b16 %v234
    %v966 = vunpack.c.l.b16 %v235
    %v967 = vunpack.c.h.b16 %v235
    %v968 = vunpack.c.l.b16 %v236
    %v969 = vunpack.c.h.b16 %v236
    %v970 = vunpack.c.l.b16 %v237
    %v971 = vunpack.c.h.b16 %v237
    %v972 = vunpack.c.l.b16 %v238
    %v973 = vunpack.c.h.b16 %v238
    %v974 = vunpack.c.l.b16 %v239
    %v975 = vunpack.c.h.b16 %v239
    %v976 = vunpack.c.l.b16 %v240
    %v977 = vunpack.c.h.b16 %v240
    %v978 = vunpack.c.l.b16 %v241
    %v979 = vunpack.c.h.b16 %v241
    %v980 = vunpack.c.l.b16 %v242
    %v981 = vunpack.c.h.b16 %v242
    %v982 = vunpack.c.l.b16 %v243
    %v983 = vunpack.c.h.b16 %v243
    %v984 = vunpack.c.l.b16 %v244
    %v985 = vunpack.c.h.b16 %v244
    %v986 = vunpack.c.l.b16 %v245
    %v987 = vunpack.c.h.b16 %v245
    %v988 = vunpack.c.l.b16 %v246
    %v989 = vunpack.c.h.b16 %v246
    %v990 = vunpack.c.l.b16 %v247
    %v991 = vunpack.c.h.b16 %v247
    %v992 = vunpack.c.l.b16 %v248
    %v993 = vunpack.c.h.b16 %v248
    %v994 = vunpack.c.l.b16 %v249
    %v995 = vunpack.c.h.b16 %v249
    %v996 = vunpack.c.l.b16 %v250
    %v997 = vunpack.c.h.b16 %v250
    %v998 = vunpack.c.l.b16 %v251
    %v999 = vunpack.c.h.b16 %v251
    %v1000 = vunpack.c.l.b16 %v252
    %v1001 = vunpack.c.h.b16 %v252
    %v1002 = vunpack.c.l.b16 %v253
    %v1003 = vunpack.c.h.b16 %v253
    %v1004 = vunpack.c.l.b16 %v254
    %v1005 = vunpack.c.h.b16 %v254
    %v1006 = vunpack.c.l.b16 %v255
    %v1007 = vunpack.c.h.b16 %v255
    %v1008 = vunpack.c.l.b16 %v256
    %v1009 = vunpack.c.h.b16 %v256
    %v1010 = vunpack.c.l.b16 %v257
    %v1011 = vunpack.c.h.b16 %v257
    %v1012 = vunpack.c.l.b16 %v258
    %v1013 = vunpack.c.h.b16 %v258
    %v1014 = vunpack.c.l.b16 %v259
    %v1015 = vunpack.c.h.b16 %v259
    %v1016 = vunpack.c.l.b16 %v260
    %v1017 = vunpack.c.h.b16 %v260
    %v1018 = vunpack.c.l.b16 %v261
    %v1019 = vunpack.c.h.b16 %v261
    %v1020 = vunpack.c.l.b16 %v262
    %v1021 = vunpack.c.h.b16 %v262
    %v1022 = vunpack.c.l.b16 %v263
    %v1023 = vunpack.c.h.b16 %v263
    %v1024 = vunpack.c.l.b16 %v264
    %v1025 = vunpack.c.h.b16 %v264
    %v1026 = vunpack.c.l.b16 %v265
    %v1027 = vunpack.c.h.b16 %v265
    %v1028 = vunpack.c.l.b16 %v266
    %v1029 = vunpack.c.h.b16 %v266
    %v1030 = vunpack.c.l.b16 %v267
    %v1031 = vunpack.c.h.b16 %v267
    %v1032 = vunpack.c.l.b16 %v268
    %v1033 = vunpack.c.h.b16 %v268
    %v1034 = vunpack.c.l.b16 %v269
    %v1035 = vunpack.c.h.b16 %v269
    %v1036 = vunpack.c.l.b16 %v270
    %v1037 = vunpack.c.h.b16 %v270
    %v1038 = vunpack.c.l.b16 %v271
    %v1039 = vunpack.c.h.b16 %v271
    %v1040 = vunpack.c.l.b16 %v272
    %v1041 = vunpack.c.h.b16 %v272
    %v1042 = vunpack.c.l.b16 %v273
    %v1043 = vunpack.c.h.b16 %v273
    %v1044 = vunpack.c.l.b16 %v274
    %v1045 = vunpack.c.h.b16 %v274
    %v1046 = vunpack.c.l.b16 %v275
    %v1047 = vunpack.c.h.b16 %v275
    %v1048 = vunpack.c.l.b16 %v276
    %v1049 = vunpack.c.h.b16 %v276
    %v1050 = vunpack.c.l.b16 %v277
    %v1051 = vunpack.c.h.b16 %v277
    %v1052 = vunpack.c.l.b16 %v278
    %v1053 = vunpack.c.h.b16 %v278
    %v1054 = vunpack.c.l.b16 %v279
    %v1055 = vunpack.c.h.b16 %v279
    %v1056 = vunpack.c.l.b16 %v280
    %v1057 = vunpack.c.h.b16 %v280
    %v1058 = vunpack.c.l.b16 %v281
    %v1059 = vunpack.c.h.b16 %v281
    %v1060 = vunpack.c.l.b16 %v282
    %v1061 = vunpack.c.h.b16 %v282
    %v1062 = vunpack.c.l.b16 %v283
    %v1063 = vunpack.c.h.b16 %v283
    %v1064 = vunpack.c.l.b16 %v284
    %v1065 = vunpack.c.h.b16 %v284
    %v1066 = vunpack.c.l.b16 %v285
    %v1067 = vunpack.c.h.b16 %v285
    %v1068 = vunpack.c.l.b16 %v286
    %v1069 = vunpack.c.h.b16 %v286
    %v1070 = vunpack.c.l.b16 %v287
    %v1071 = vunpack.c.h.b16 %v287
    %v1072 = vunpack.c.l.b16 %v288
    %v1073 = vunpack.c.h.b16 %v288
    %v1074 = vunpack.c.l.b16 %v289
    %v1075 = vunpack.c.h.b16 %v289
    %v1076 = vunpack.c.l.b16 %v290
    %v1077 = vunpack.c.h.b16 %v290
    %v1078 = vunpack.c.l.b16 %v291
    %v1079 = vunpack.c.h.b16 %v291
    %v1080 = vunpack.c.l.b16 %v292
    %v1081 = vunpack.c.h.b16 %v292
    %v1082 = vunpack.c.l.b16 %v293
    %v1083 = vunpack.c.h.b16 %v293
    %v1084 = vunpack.c.l.b16 %v294
    %v1085 = vunpack.c.h.b16 %v294
    %v1086 = vunpack.c.l.b16 %v295
    %v1087 = vunpack.c.h.b16 %v295
    %v1088 = vunpack.c.l.b16 %v296
    %v1089 = vunpack.c.h.b16 %v296
    %v1090 = vunpack.c.l.b16 %v297
    %v1091 = vunpack.c.h.b16 %v297
    %v1092 = vunpack.c.l.b16 %v298
    %v1093 = vunpack.c.h.b16 %v298
    %v1094 = vunpack.c.l.b16 %v299
    %v1095 = vunpack.c.h.b16 %v299
    %v1096 = vunpack.c.l.b16 %v300
    %v1097 = vunpack.c.h.b16 %v300
    %v1098 = vunpack.c.l.b16 %v301
    %v1099 = vunpack.c.h.b16 %v301
    %v1100 = vunpack.c.l.b16 %v302
    %v1101 = vunpack.c.h.b16 %v302
    %v1102 = vunpack.c.l.b16 %v303
    %v1103 = vunpack.c.h.b16 %v303
    %v1104 = vunpack.c.l.b16 %v304
    %v1105 = vunpack.c.h.b16 %v304
    %v1106 = vunpack.c.l.b16 %v305
    %v1107 = vunpack.c.h.b16 %v305
    %v1108 = vunpack.c.l.b16 %v306
    %v1109 = vunpack.c.h.b16 %v306
    %v1110 = vunpack.c.l.b16 %v307
    %v1111 = vunpack.c.h.b16 %v307
    %v1112 = vunpack.c.l.b16 %v308
    %v1113 = vunpack.c.h.b16 %v308
    %v1114 = vunpack.c.l.b16 %v309
    %v1115 = vunpack.c.h.b16 %v309
    %v1116 = vunpack.c.l.b16 %v310
    %v1117 = vunpack.c.h.b16 %v310
    %v1118 = vunpack.c.l.b16 %v311
    %v1119 = vunpack.c.h.b16 %v311
    %v1120 = vunpack.c.l.b16 %v312
    %v1121 = vunpack.c.h.b16 %v312
    %v1122 = vunpack.c.l.b16 %v313
    %v1123 = vunpack.c.h.b16 %v313
    %v1124 = vunpack.c.l.b16 %v314
    %v1125 = vunpack.c.h.b16 %v314
    %v1126 = vunpack.c.l.b16 %v315
    %v1127 = vunpack.c.h.b16 %v315
    %v1128 = vunpack.c.l.b16 %v316
    %v1129 = vunpack.c.h.b16 %v316
    %v1130 = vunpack.c.l.b16 %v317
    %v1131 = vunpack.c.h.b16 %v317
    %v1132 = vunpack.c.l.b16 %v318
    %v1133 = vunpack.c.h.b16 %v318
    %v1134 = vunpack.c.l.b16 %v319
    %v1135 = vunpack.c.h.b16 %v319
    %v1136 = vunpack.c.l.b16 %v320
    %v1137 = vunpack.c.h.b16 %v320
    %v1138 = vunpack.c.l.b16 %v321
    %v1139 = vunpack.c.h.b16 %v321
    %v1140 = vunpack.c.l.b16 %v322
    %v1141 = vunpack.c.h.b16 %v322
    %v1142 = vunpack.c.l.b16 %v323
    %v1143 = vunpack.c.h.b16 %v323
    %v1144 = vunpack.c.l.b16 %v324
    %v1145 = vunpack.c.h.b16 %v324
    %v1146 = vunpack.c.l.b16 %v325
    %v1147 = vunpack.c.h.b16 %v325
    %v1148 = vunpack.c.l.b16 %v326
    %v1149 = vunpack.c.h.b16 %v326
    %v1150 = vunpack.c.l.b16 %v327
    %v1151 = vunpack.c.h.b16 %v327
    %v1152 = vunpack.c.l.b16 %v328
    %v1153 = vunpack.c.h.b16 %v328
    %v1154 = vunpack.c.l.b16 %v329
    %v1155 = vunpack.c.h.b16 %v329
    %v1156 = vunpack.c.l.b16 %v330
    %v1157 = vunpack.c.h.b16 %v330
    %v1158 = vunpack.c.l.b16 %v331
    %v1159 = vunpack.c.h.b16 %v331
    %v1160 = vunpack.c.l.b16 %v332
    %v1161 = vunpack.c.h.b16 %v332
    %v1162 = vunpack.c.l.b16 %v333
    %v1163 = vunpack.c.h.b16 %v333
    %v1164 = vpack.c.b16 %v660, %v652
    %v1165 = vpack.c.b16 %v661, %v653
    %v1166 = vpack.c.b16 %v662, %v654
    %v1167 = vpack.c.b16 %v663, %v655
    %v1168 = vpack.c.b16 %v664, %v656
    %v1169 = vpack.c.b16 %v665, %v657
    %v1170 = vpack.c.b16 %v666, %v658
    %v1171 = vpack.c.b16 %v667, %v659
    %v1172 = vpack.c.b16 %v676, %v668
    %v1173 = vpack.c.b16 %v677, %v669
    %v1174 = vpack.c.b16 %v678, %v670
    %v1175 = vpack.c.b16 %v679, %v671
    %v1176 = vpack.c.b16 %v680, %v672
    %v1177 = vpack.c.b16 %v681, %v673
    %v1178 = vpack.c.b16 %v682, %v674
    %v1179 = vpack.c.b16 %v683, %v675
    %v1180 = vpack.c.b16 %v692, %v684
    %v1181 = vpack.c.b16 %v693, %v685
    %v1182 = vpack.c.b16 %v694, %v686
    %v1183 = vpack.c.b16 %v695, %v687
    %v1184 = vpack.c.b16 %v696, %v688
    %v1185 = vpack.c.b16 %v697, %v689
    %v1186 = vpack.c.b16 %v698, %v690
    %v1187 = vpack.c.b16 %v699, %v691
    %v1188 = vpack.c.b16 %v708, %v700
    %v1189 = vpack.c.b16 %v709, %v701
    %v1190 = vpack.c.b16 %v710, %v702
    %v1191 = vpack.c.b16 %v711, %v703
    %v1192 = vpack.c.b16 %v712, %v704
    %v1193 = vpack.c.b16 %v713, %v705
    %v1194 = vpack.c.b16 %v714, %v706
    %v1195 = vpack.c.b16 %v715, %v707
    %v1196 = vpack.c.b16 %v724, %v716
    %v1197 = vpack.c.b16 %v725, %v717
    %v1198 = vpack.c.b16 %v726, %v718
    %v1199 = vpack.c.b16 %v727, %v719
    %v1200 = vpack.c.b16 %v728, %v720
    %v1201 = vpack.c.b16 %v729, %v721
    %v1202 = vpack.c.b16 %v730, %v722
    %v1203 = vpack.c.b16 %v731, %v723
    %v1204 = vpack.c.b16 %v740, %v732
    %v1205 = vpack.c.b16 %v741, %v733
    %v1206 = vpack.c.b16 %v742, %v734
    %v1207 = vpack.c.b16 %v743, %v735
    %v1208 = vpack.c.b16 %v744, %v736
    %v1209 = vpack.c.b16 %v745, %v737
    %v1210 = vpack.c.b16 %v746, %v738
    %v1211 = vpack.c.b16 %v747, %v739
    %v1212 = vpack.c.b16 %v756, %v748
    %v1213 = vpack.c.b16 %v757, %v749
    %v1214 = vpack.c.b16 %v758, %v750
    %v1215 = vpack.c.b16 %v759, %v751
    %v1216 = vpack.c.b16 %v760, %v752
    %v1217 = vpack.c.b16 %v761, %v753
    %v1218 = vpack.c.b16 %v762, %v754
    %v1219 = vpack.c.b16 %v763, %v755
    %v1220 = vpack.c.b16 %v772, %v764
    %v1221 = vpack.c.b16 %v773, %v765
    %v1222 = vpack.c.b16 %v774, %v766
    %v1223 = vpack.c.b16 %v775, %v767
    %v1224 = vpack.c.b16 %v776, %v768
    %v1225 = vpack.c.b16 %v777, %v769
    %v1226 = vpack.c.b16 %v778, %v770
    %v1227 = vpack.c.b16 %v779, %v771
    %v1228 = vpack.c.b16 %v788, %v780
    %v1229 = vpack.c.b16 %v789, %v781
    %v1230 = vpack.c.b16 %v790, %v782
    %v1231 = vpack.c.b16 %v791, %v783
    %v1232 = vpack.c.b16 %v792, %v784
    %v1233 = vpack.c.b16 %v793, %v785
    %v1234 = vpack.c.b16 %v794, %v786
    %v1235 = vpack.c.b16 %v795, %v787
    %v1236 = vpack.c.b16 %v804, %v796
    %v1237 = vpack.c.b16 %v805, %v797
    %v1238 = vpack.c.b16 %v806, %v798
    %v1239 = vpack.c.b16 %v807, %v799
    %v1240 = vpack.c.b16 %v808, %v800
    %v1241 = vpack.c.b16 %v809, %v801
    %v1242 = vpack.c.b16 %v810, %v802
    %v1243 = vpack.c.b16 %v811, %v803
    %v1244 = vpack.c.b16 %v820, %v812
    %v1245 = vpack.c.b16 %v821, %v813
    %v1246 = vpack.c.b16 %v822, %v814
    %v1247 = vpack.c.b16 %v823, %v815
    %v1248 = vpack.c.b16 %v824, %v816
    %v1249 = vpack.c.b16 %v825, %v817
    %v1250 = vpack.c.b16 %v826, %v818
    %v1251 = vpack.c.b16 %v827, %v819
    %v1252 = vpack.c.b16 %v836, %v828
    %v1253 = vpack.c.b16 %v837, %v829
    %v1254 = vpack.c.b16 %v838, %v830
    %v1255 = vpack.c.b16 %v839, %v831
    %v1256 = vpack.c.b16 %v840, %v832
    %v1257 = vpack.c.b16 %v841, %v833
    %v1258 = vpack.c.b16 %v842, %v834
    %v1259 = vpack.c.b16 %v843, %v835
    %v1260 = vpack.c.b16 %v852, %v844
    %v1261 = vpack.c.b16 %v853, %v845
    %v1262 = vpack.c.b16 %v854, %v846
    %v1263 = vpack.c.b16 %v855, %v847
    %v1264 = vpack.c.b16 %v856, %v848
    %v1265 = vpack.c.b16 %v857, %v849
    %v1266 = vpack.c.b16 %v858, %v850
    %v1267 = vpack.c.b16 %v859, %v851
    %v1268 = vpack.c.b16 %v868, %v860
    %v1269 = vpack.c.b16 %v869, %v861
    %v1270 = vpack.c.b16 %v870, %v862
    %v1271 = vpack.c.b16 %v871, %v863
    %v1272 = vpack.c.b16 %v872, %v864
    %v1273 = vpack.c.b16 %v873, %v865
    %v1274 = vpack.c.b16 %v874, %v866
    %v1275 = vpack.c.b16 %v875, %v867
    %v1276 = vpack.c.b16 %v884, %v876
    %v1277 = vpack.c.b16 %v885, %v877
    %v1278 = vpack.c.b16 %v886, %v878
    %v1279 = vpack.c.b16 %v887, %v879
    %v1280 = vpack.c.b16 %v888, %v880
    %v1281 = vpack.c.b16 %v889, %v881
    %v1282 = vpack.c.b16 %v890, %v882
    %v1283 = vpack.c.b16 %v891, %v883
    %v1284 = vpack.c.b16 %v900, %v892
    %v1285 = vpack.c.b16 %v901, %v893
    %v1286 = vpack.c.b16 %v902, %v894
    %v1287 = vpack.c.b16 %v903, %v895
    %v1288 = vpack.c.b16 %v904, %v896
    %v1289 = vpack.c.b16 %v905, %v897
    %v1290 = vpack.c.b16 %v906, %v898
    %v1291 = vpack.c.b16 %v907, %v899
    %v1292 = vpack.c.b16 %v916, %v908
    %v1293 = vpack.c.b16 %v917, %v909
    %v1294 = vpack.c.b16 %v918, %v910
    %v1295 = vpack.c.b16 %v919, %v911
    %v1296 = vpack.c.b16 %v920, %v912
    %v1297 = vpack.c.b16 %v921, %v913
    %v1298 = vpack.c.b16 %v922, %v914
    %v1299 = vpack.c.b16 %v923, %v915
    %v1300 = vpack.c.b16 %v932, %v924
    %v1301 = vpack.c.b16 %v933, %v925
    %v1302 = vpack.c.b16 %v934, %v926
    %v1303 = vpack.c.b16 %v935, %v927
    %v1304 = vpack.c.b16 %v936, %v928
    %v1305 = vpack.c.b16 %v937, %v929
    %v1306 = vpack.c.b16 %v938, %v930
    %v1307 = vpack.c.b16 %v939, %v931
    %v1308 = vpack.c.b16 %v948, %v940
    %v1309 = vpack.c.b16 %v949, %v941
    %v1310 = vpack.c.b16 %v950, %v942
    %v1311 = vpack.c.b16 %v951, %v943
    %v1312 = vpack.c.b16 %v952, %v944
    %v1313 = vpack.c.b16 %v953, %v945
    %v1314 = vpack.c.b16 %v954, %v946
    %v1315 = vpack.c.b16 %v955, %v947
    %v1316 = vpack.c.b16 %v964, %v956
    %v1317 = vpack.c.b16 %v965, %v957
    %v1318 = vpack.c.b16 %v966, %v958
    %v1319 = vpack.c.b16 %v967, %v959
    %v1320 = vpack.c.b16 %v968, %v960
    %v1321 = vpack.c.b16 %v969, %v961
    %v1322 = vpack.c.b16 %v970, %v962
    %v1323 = vpack.c.b16 %v971, %v963
    %v1324 = vpack.c.b16 %v980, %v972
    %v1325 = vpack.c.b16 %v981, %v973
    %v1326 = vpack.c.b16 %v982, %v974
    %v1327 = vpack.c.b16 %v983, %v975
    %v1328 = vpack.c.b16 %v984, %v976
    %v1329 = vpack.c.b16 %v985, %v977
    %v1330 = vpack.c.b16 %v986, %v978
    %v1331 = vpack.c.b16 %v987, %v979
    %v1332 = vpack.c.b16 %v996, %v988
    %v1333 = vpack.c.b16 %v997, %v989
    %v1334 = vpack.c.b16 %v998, %v990
    %v1335 = vpack.c.b16 %v999, %v991
    %v1336 = vpack.c.b16 %v1000, %v992
    %v1337 = vpack.c.b16 %v1001, %v993
    %v1338 = vpack.c.b16 %v1002, %v994
    %v1339 = vpack.c.b16 %v1003, %v995
    %v1340 = vpack.c.b16 %v1012, %v1004
    %v1341 = vpack.c.b16 %v1013, %v1005
    %v1342 = vpack.c.b16 %v1014, %v1006
    %v1343 = vpack.c.b16 %v1015, %v1007
    %v1344 = vpack.c.b16 %v1016, %v1008
    %v1345 = vpack.c.b16 %v1017, %v1009
    %v1346 = vpack.c.b16 %v1018, %v1010
    %v1347 = vpack.c.b16 %v1019, %v1011
    %v1348 = vpack.c.b16 %v1028, %v1020
    %v1349 = vpack.c.b16 %v1029, %v1021
    %v1350 = vpack.c.b16 %v1030, %v1022
    %v1351 = vpack.c.b16 %v1031, %v1023
    %v1352 = vpack.c.b16 %v1032, %v1024
    %v1353 = vpack.c.b16 %v1033, %v1025
    %v1354 = vpack.c.b16 %v1034, %v1026
    %v1355 = vpack.c.b16 %v1035, %v1027
    %v1356 = vpack.c.b16 %v1044, %v1036
    %v1357 = vpack.c.b16 %v1045, %v1037
    %v1358 = vpack.c.b16 %v1046, %v1038
    %v1359 = vpack.c.b16 %v1047, %v1039
    %v1360 = vpack.c.b16 %v1048, %v1040
    %v1361 = vpack.c.b16 %v1049, %v1041
    %v1362 = vpack.c.b16 %v1050, %v1042
    %v1363 = vpack.c.b16 %v1051, %v1043
    %v1364 = vpack.c.b16 %v1060, %v1052
    %v1365 = vpack.c.b16 %v1061, %v1053
    %v1366 = vpack.c.b16 %v1062, %v1054
    %v1367 = vpack.c.b16 %v1063, %v1055
    %v1368 = vpack.c.b16 %v1064, %v1056
    %v1369 = vpack.c.b16 %v1065, %v1057
    %v1370 = vpack.c.b16 %v1066, %v1058
    %v1371 = vpack.c.b16 %v1067, %v1059
    %v1372 = vpack.c.b16 %v1076, %v1068
    %v1373 = vpack.c.b16 %v1077, %v1069
    %v1374 = vpack.c.b16 %v1078, %v1070
    %v1375 = vpack.c.b16 %v1079, %v1071
    %v1376 = vpack.c.b16 %v1080, %v1072
    %v1377 = vpack.c.b16 %v1081, %v1073
    %v1378 = vpack.c.b16 %v1082, %v1074
    %v1379 = vpack.c.b16 %v1083, %v1075
    %v1380 = vpack.c.b16 %v1092, %v1084
    %v1381 = vpack.c.b16 %v1093, %v1085
    %v1382 = vpack.c.b16 %v1094, %v1086
    %v1383 = vpack.c.b16 %v1095, %v1087
    %v1384 = vpack.c.b16 %v1096, %v1088
    %v1385 = vpack.c.b16 %v1097, %v1089
    %v1386 = vpack.c.b16 %v1098, %v1090
    %v1387 = vpack.c.b16 %v1099, %v1091
    %v1388 = vpack.c.b16 %v1108, %v1100
    %v1389 = vpack.c.b16 %v1109, %v1101
    %v1390 = vpack.c.b16 %v1110, %v1102
    %v1391 = vpack.c.b16 %v1111, %v1103
    %v1392 = vpack.c.b16 %v1112, %v1104
    %v1393 = vpack.c.b16 %v1113, %v1105
    %v1394 = vpack.c.b16 %v1114, %v1106
    %v1395 = vpack.c.b16 %v1115, %v1107
    %v1396 = vpack.c.b16 %v1124, %v1116
    %v1397 = vpack.c.b16 %v1125, %v1117
    %v1398 = vpack.c.b16 %v1126, %v1118
    %v1399 = vpack.c.b16 %v1127, %v1119
    %v1400 = vpack.c.b16 %v1128, %v1120
    %v1401 = vpack.c.b16 %v1129, %v1121
    %v1402 = vpack.c.b16 %v1130, %v1122
    %v1403 = vpack.c.b16 %v1131, %v1123
    %v1404 = vpack.c.b16 %v1140, %v1132
    %v1405 = vpack.c.b16 %v1141, %v1133
    %v1406 = vpack.c.b16 %v1142, %v1134
    %v1407 = vpack.c.b16 %v1143, %v1135
    %v1408 = vpack.c.b16 %v1144, %v1136
    %v1409 = vpack.c.b16 %v1145, %v1137
    %v1410 = vpack.c.b16 %v1146, %v1138
    %v1411 = vpack.c.b16 %v1147, %v1139
    %v1412 = vpack.c.b16 %v1156, %v1148
    %v1413 = vpack.c.b16 %v1157, %v1149
    %v1414 = vpack.c.b16 %v1158, %v1150
    %v1415 = vpack.c.b16 %v1159, %v1151
    %v1416 = vpack.c.b16 %v1160, %v1152
    %v1417 = vpack.c.b16 %v1161, %v1153
    %v1418 = vpack.c.b16 %v1162, %v1154
    %v1419 = vpack.c.b16 %v1163, %v1155
    %1676 = vmatprep.subr.bf16.mxu0 %v1165
    %1677 = vmatpush1.bf16.msra.mxu0 %v1164
    %1678 = vmatprep.subr.bf16.mxu0 %v1173
    %1679 = vmatpush1.bf16.msra.mxu0 %v1172
    %1680 = vmatprep.subr.bf16.mxu0 %v1181
    %1681 = vmatpush1.bf16.msra.mxu0 %v1180
    %1682 = vmatprep.subr.bf16.mxu0 %v1189
    %1683 = vmatpush1.bf16.msra.mxu0 %v1188
    %1684 = vmatprep.subr.bf16.mxu0 %v1197
    %1685 = vmatpush1.bf16.msra.mxu0 %v1196
    %1686 = vmatprep.subr.bf16.mxu0 %v1205
    %1687 = vmatpush1.bf16.msra.mxu0 %v1204
    %1688 = vmatprep.subr.bf16.mxu0 %v1213
    %1689 = vmatpush1.bf16.msra.mxu0 %v1212
    %1690 = vmatprep.subr.bf16.mxu0 %v1221
    %1691 = vmatpush1.bf16.msra.mxu0 %v1220
    %1692 = vmatprep.subr.bf16.mxu0 %v1229
    %1693 = vmatpush1.bf16.msra.mxu0 %v1228
    %1694 = vmatprep.subr.bf16.mxu0 %v1237
    %1695 = vmatpush1.bf16.msra.mxu0 %v1236
    %1696 = vmatprep.subr.bf16.mxu0 %v1245
    %1697 = vmatpush1.bf16.msra.mxu0 %v1244
    %1698 = vmatprep.subr.bf16.mxu0 %v1253
    %1699 = vmatpush1.bf16.msra.mxu0 %v1252
    %1700 = vmatprep.subr.bf16.mxu0 %v1261
    %1701 = vmatpush1.bf16.msra.mxu0 %v1260
    %1702 = vmatprep.subr.bf16.mxu0 %v1269
    %1703 = vmatpush1.bf16.msra.mxu0 %v1268
    %1704 = vmatprep.subr.bf16.mxu0 %v1277
    %1705 = vmatpush1.bf16.msra.mxu0 %v1276
    %1706 = vmatprep.subr.bf16.mxu0 %v1285
    %1707 = vmatpush1.bf16.msra.mxu0 %v1284
    %1708 = vmatprep.mubr.bf16.mxu0 %v389
    %1709 = vmatmul.mubr.bf16.gmra.mrb[0].mxu0 %v388
    %v1710 = vpop.f32.mrb[0].mxu0
    %v1711 = vadd.f32 %v339, %v1710
    %v1712 = vpop.f32.mrb[0].mxu0
    %v1713 = vadd.f32 %v343, %v1712
    %v1714 = vpop.f32.mrb[0].mxu0
    %v1715 = vadd.f32 %v339, %v1714
    %v1716 = vpop.f32.mrb[0].mxu0
    %v1717 = vadd.f32 %v343, %v1716
    %1718 = vdwg.mxu0
    %1719 = vmatprep.subr.bf16.mxu0 %v1293
    %1720 = vmatpush1.bf16.msra.mxu0 %v1292
    %1721 = vmatprep.subr.bf16.mxu0 %v1301
    %1722 = vmatpush1.bf16.msra.mxu0 %v1300
    %1723 = vmatprep.subr.bf16.mxu0 %v1309
    %1724 = vmatpush1.bf16.msra.mxu0 %v1308
    %1725 = vmatprep.subr.bf16.mxu0 %v1317
    %1726 = vmatpush1.bf16.msra.mxu0 %v1316
    %1727 = vmatprep.subr.bf16.mxu0 %v1325
    %1728 = vmatpush1.bf16.msra.mxu0 %v1324
    %1729 = vmatprep.subr.bf16.mxu0 %v1333
    %1730 = vmatpush1.bf16.msra.mxu0 %v1332
    %1731 = vmatprep.subr.bf16.mxu0 %v1341
    %1732 = vmatpush1.bf16.msra.mxu0 %v1340
    %1733 = vmatprep.subr.bf16.mxu0 %v1349
    %1734 = vmatpush1.bf16.msra.mxu0 %v1348
    %1735 = vmatprep.subr.bf16.mxu0 %v1357
    %1736 = vmatpush1.bf16.msra.mxu0 %v1356
    %1737 = vmatprep.subr.bf16.mxu0 %v1365
    %1738 = vmatpush1.bf16.msra.mxu0 %v1364
    %1739 = vmatprep.subr.bf16.mxu0 %v1373
    %1740 = vmatpush1.bf16.msra.mxu0 %v1372
    %1741 = vmatprep.subr.bf16.mxu0 %v1381
    %1742 = vmatpush1.bf16.msra.mxu0 %v1380
    %1743 = vmatprep.subr.bf16.mxu0 %v1389
    %1744 = vmatpush1.bf16.msra.mxu0 %v1388
    %1745 = vmatprep.subr.bf16.mxu0 %v1397
    %1746 = vmatpush1.bf16.msra.mxu0 %v1396
    %1747 = vmatprep.subr.bf16.mxu0 %v1405
    %1748 = vmatpush1.bf16.msra.mxu0 %v1404
    %1749 = vmatprep.subr.bf16.mxu0 %v1413
    %1750 = vmatpush1.bf16.msra.mxu0 %v1412
    %1751 = vmatprep.mubr.bf16.mxu0 %v391
    %1752 = vmatmul.mubr.bf16.gmra.mrb[0].mxu0 %v390
    %v1753 = vpop.f32.mrb[0].mxu0
    %v1754 = vadd.f32 %v1711, %v1753
    %v1755 = vpop.f32.mrb[0].mxu0
    %v1756 = vadd.f32 %v1713, %v1755
    %v1757 = vpop.f32.mrb[0].mxu0
    %v1758 = vadd.f32 %v1715, %v1757
    %v1759 = vpop.f32.mrb[0].mxu0
    %v1760 = vadd.f32 %v1717, %v1759
    %1761 = vdwg.mxu0
    %1762 = vmatprep.subr.bf16.mxu0 %v1167
    %1763 = vmatpush1.bf16.msra.mxu0 %v1166
    %1764 = vmatprep.subr.bf16.mxu0 %v1175
    %1765 = vmatpush1.bf16.msra.mxu0 %v1174
    %1766 = vmatprep.subr.bf16.mxu0 %v1183
    %1767 = vmatpush1.bf16.msra.mxu0 %v1182
    %1768 = vmatprep.subr.bf16.mxu0 %v1191
    %1769 = vmatpush1.bf16.msra.mxu0 %v1190
    %1770 = vmatprep.subr.bf16.mxu0 %v1199
    %1771 = vmatpush1.bf16.msra.mxu0 %v1198
    %1772 = vmatprep.subr.bf16.mxu0 %v1207
    %1773 = vmatpush1.bf16.msra.mxu0 %v1206
    %1774 = vmatprep.subr.bf16.mxu0 %v1215
    %1775 = vmatpush1.bf16.msra.mxu0 %v1214
    %1776 = vmatprep.subr.bf16.mxu0 %v1223
    %1777 = vmatpush1.bf16.msra.mxu0 %v1222
    %1778 = vmatprep.subr.bf16.mxu0 %v1231
    %1779 = vmatpush1.bf16.msra.mxu0 %v1230
    %1780 = vmatprep.subr.bf16.mxu0 %v1239
    %1781 = vmatpush1.bf16.msra.mxu0 %v1238
    %1782 = vmatprep.subr.bf16.mxu0 %v1247
    %1783 = vmatpush1.bf16.msra.mxu0 %v1246
    %1784 = vmatprep.subr.bf16.mxu0 %v1255
    %1785 = vmatpush1.bf16.msra.mxu0 %v1254
    %1786 = vmatprep.subr.bf16.mxu0 %v1263
    %1787 = vmatpush1.bf16.msra.mxu0 %v1262
    %1788 = vmatprep.subr.bf16.mxu0 %v1271
    %1789 = vmatpush1.bf16.msra.mxu0 %v1270
    %1790 = vmatprep.subr.bf16.mxu0 %v1279
    %1791 = vmatpush1.bf16.msra.mxu0 %v1278
    %1792 = vmatprep.subr.bf16.mxu0 %v1287
    %1793 = vmatpush1.bf16.msra.mxu0 %v1286
    %1794 = vmatprep.mubr.bf16.mxu0 %v389
    %1795 = vmatmul.mubr.bf16.gmra.mrb[0].mxu0 %v388
    %v1796 = vpop.f32.mrb[0].mxu0
    %v1797 = vadd.f32 %v347, %v1796
    %v1798 = vpop.f32.mrb[0].mxu0
    %v1799 = vadd.f32 %v351, %v1798
    %v1800 = vpop.f32.mrb[0].mxu0
    %v1801 = vadd.f32 %v347, %v1800
    %v1802 = vpop.f32.mrb[0].mxu0
    %v1803 = vadd.f32 %v351, %v1802
    %1804 = vdwg.mxu0
    %1805 = vmatprep.subr.bf16.mxu0 %v1295
    %1806 = vmatpush1.bf16.msra.mxu0 %v1294
    %1807 = vmatprep.subr.bf16.mxu0 %v1303
    %1808 = vmatpush1.bf16.msra.mxu0 %v1302
    %1809 = vmatprep.subr.bf16.mxu0 %v1311
    %1810 = vmatpush1.bf16.msra.mxu0 %v1310
    %1811 = vmatprep.subr.bf16.mxu0 %v1319
    %1812 = vmatpush1.bf16.msra.mxu0 %v1318
    %1813 = vmatprep.subr.bf16.mxu0 %v1327
    %1814 = vmatpush1.bf16.msra.mxu0 %v1326
    %1815 = vmatprep.subr.bf16.mxu0 %v1335
    %1816 = vmatpush1.bf16.msra.mxu0 %v1334
    %1817 = vmatprep.subr.bf16.mxu0 %v1343
    %1818 = vmatpush1.bf16.msra.mxu0 %v1342
    %1819 = vmatprep.subr.bf16.mxu0 %v1351
    %1820 = vmatpush1.bf16.msra.mxu0 %v1350
    %1821 = vmatprep.subr.bf16.mxu0 %v1359
    %1822 = vmatpush1.bf16.msra.mxu0 %v1358
    %1823 = vmatprep.subr.bf16.mxu0 %v1367
    %1824 = vmatpush1.bf16.msra.mxu0 %v1366
    %1825 = vmatprep.subr.bf16.mxu0 %v1375
    %1826 = vmatpush1.bf16.msra.mxu0 %v1374
    %1827 = vmatprep.subr.bf16.mxu0 %v1383
    %1828 = vmatpush1.bf16.msra.mxu0 %v1382
    %1829 = vmatprep.subr.bf16.mxu0 %v1391
    %1830 = vmatpush1.bf16.msra.mxu0 %v1390
    %1831 = vmatprep.subr.bf16.mxu0 %v1399
    %1832 = vmatpush1.bf16.msra.mxu0 %v1398
    %1833 = vmatprep.subr.bf16.mxu0 %v1407
    %1834 = vmatpush1.bf16.msra.mxu0 %v1406
    %1835 = vmatprep.subr.bf16.mxu0 %v1415
    %1836 = vmatpush1.bf16.msra.mxu0 %v1414
    %1837 = vmatprep.mubr.bf16.mxu0 %v391
    %1838 = vmatmul.mubr.bf16.gmra.mrb[0].mxu0 %v390
    %v1839 = vpop.f32.mrb[0].mxu0
    %v1840 = vadd.f32 %v1797, %v1839
    %v1841 = vpop.f32.mrb[0].mxu0
    %v1842 = vadd.f32 %v1799, %v1841
    %v1843 = vpop.f32.mrb[0].mxu0
    %v1844 = vadd.f32 %v1801, %v1843
    %v1845 = vpop.f32.mrb[0].mxu0
    %v1846 = vadd.f32 %v1803, %v1845
    %1847 = vdwg.mxu0
    %1848 = vmatprep.subr.bf16.mxu0 %v1169
    %1849 = vmatpush1.bf16.msra.mxu0 %v1168
    %1850 = vmatprep.subr.bf16.mxu0 %v1177
    %1851 = vmatpush1.bf16.msra.mxu0 %v1176
    %1852 = vmatprep.subr.bf16.mxu0 %v1185
    %1853 = vmatpush1.bf16.msra.mxu0 %v1184
    %1854 = vmatprep.subr.bf16.mxu0 %v1193
    %1855 = vmatpush1.bf16.msra.mxu0 %v1192
    %1856 = vmatprep.subr.bf16.mxu0 %v1201
    %1857 = vmatpush1.bf16.msra.mxu0 %v1200
    %1858 = vmatprep.subr.bf16.mxu0 %v1209
    %1859 = vmatpush1.bf16.msra.mxu0 %v1208
    %1860 = vmatprep.subr.bf16.mxu0 %v1217
    %1861 = vmatpush1.bf16.msra.mxu0 %v1216
    %1862 = vmatprep.subr.bf16.mxu0 %v1225
    %1863 = vmatpush1.bf16.msra.mxu0 %v1224
    %1864 = vmatprep.subr.bf16.mxu0 %v1233
    %1865 = vmatpush1.bf16.msra.mxu0 %v1232
    %1866 = vmatprep.subr.bf16.mxu0 %v1241
    %1867 = vmatpush1.bf16.msra.mxu0 %v1240
    %1868 = vmatprep.subr.bf16.mxu0 %v1249
    %1869 = vmatpush1.bf16.msra.mxu0 %v1248
    %1870 = vmatprep.subr.bf16.mxu0 %v1257
    %1871 = vmatpush1.bf16.msra.mxu0 %v1256
    %1872 = vmatprep.subr.bf16.mxu0 %v1265
    %1873 = vmatpush1.bf16.msra.mxu0 %v1264
    %1874 = vmatprep.subr.bf16.mxu0 %v1273
    %1875 = vmatpush1.bf16.msra.mxu0 %v1272
    %1876 = vmatprep.subr.bf16.mxu0 %v1281
    %1877 = vmatpush1.bf16.msra.mxu0 %v1280
    %1878 = vmatprep.subr.bf16.mxu0 %v1289
    %1879 = vmatpush1.bf16.msra.mxu0 %v1288
    %1880 = vmatprep.mubr.bf16.mxu0 %v389
    %1881 = vmatmul.mubr.bf16.gmra.mrb[0].mxu0 %v388
    %v1882 = vpop.f32.mrb[0].mxu0
    %v1883 = vadd.f32 %v355, %v1882
    %v1884 = vpop.f32.mrb[0].mxu0
    %v1885 = vadd.f32 %v359, %v1884
    %v1886 = vpop.f32.mrb[0].mxu0
    %v1887 = vadd.f32 %v355, %v1886
    %v1888 = vpop.f32.mrb[0].mxu0
    %v1889 = vadd.f32 %v359, %v1888
    %1890 = vdwg.mxu0
    %1891 = vmatprep.subr.bf16.mxu0 %v1297
    %1892 = vmatpush1.bf16.msra.mxu0 %v1296
    %1893 = vmatprep.subr.bf16.mxu0 %v1305
    %1894 = vmatpush1.bf16.msra.mxu0 %v1304
    %1895 = vmatprep.subr.bf16.mxu0 %v1313
    %1896 = vmatpush1.bf16.msra.mxu0 %v1312
    %1897 = vmatprep.subr.bf16.mxu0 %v1321
    %1898 = vmatpush1.bf16.msra.mxu0 %v1320
    %1899 = vmatprep.subr.bf16.mxu0 %v1329
    %1900 = vmatpush1.bf16.msra.mxu0 %v1328
    %1901 = vmatprep.subr.bf16.mxu0 %v1337
    %1902 = vmatpush1.bf16.msra.mxu0 %v1336
    %1903 = vmatprep.subr.bf16.mxu0 %v1345
    %1904 = vmatpush1.bf16.msra.mxu0 %v1344
    %1905 = vmatprep.subr.bf16.mxu0 %v1353
    %1906 = vmatpush1.bf16.msra.mxu0 %v1352
    %1907 = vmatprep.subr.bf16.mxu0 %v1361
    %1908 = vmatpush1.bf16.msra.mxu0 %v1360
    %1909 = vmatprep.subr.bf16.mxu0 %v1369
    %1910 = vmatpush1.bf16.msra.mxu0 %v1368
    %1911 = vmatprep.subr.bf16.mxu0 %v1377
    %1912 = vmatpush1.bf16.msra.mxu0 %v1376
    %1913 = vmatprep.subr.bf16.mxu0 %v1385
    %1914 = vmatpush1.bf16.msra.mxu0 %v1384
    %1915 = vmatprep.subr.bf16.mxu0 %v1393
    %1916 = vmatpush1.bf16.msra.mxu0 %v1392
    %1917 = vmatprep.subr.bf16.mxu0 %v1401
    %1918 = vmatpush1.bf16.msra.mxu0 %v1400
    %1919 = vmatprep.subr.bf16.mxu0 %v1409
    %1920 = vmatpush1.bf16.msra.mxu0 %v1408
    %1921 = vmatprep.subr.bf16.mxu0 %v1417
    %1922 = vmatpush1.bf16.msra.mxu0 %v1416
    %1923 = vmatprep.mubr.bf16.mxu0 %v391
    %1924 = vmatmul.mubr.bf16.gmra.mrb[0].mxu0 %v390
    %v1925 = vpop.f32.mrb[0].mxu0
    %v1926 = vadd.f32 %v1883, %v1925
    %v1927 = vpop.f32.mrb[0].mxu0
    %v1928 = vadd.f32 %v1885, %v1927
    %v1929 = vpop.f32.mrb[0].mxu0
    %v1930 = vadd.f32 %v1887, %v1929
    %v1931 = vpop.f32.mrb[0].mxu0
    %v1932 = vadd.f32 %v1889, %v1931
    %1933 = vdwg.mxu0
    %1934 = vmatprep.subr.bf16.mxu0 %v1171
    %1935 = vmatpush1.bf16.msra.mxu0 %v1170
    %1936 = vmatprep.subr.bf16.mxu0 %v1179
    %1937 = vmatpush1.bf16.msra.mxu0 %v1178
    %1938 = vmatprep.subr.bf16.mxu0 %v1187
    %1939 = vmatpush1.bf16.msra.mxu0 %v1186
    %1940 = vmatprep.subr.bf16.mxu0 %v1195
    %1941 = vmatpush1.bf16.msra.mxu0 %v1194
    %1942 = vmatprep.subr.bf16.mxu0 %v1203
    %1943 = vmatpush1.bf16.msra.mxu0 %v1202
    %1944 = vmatprep.subr.bf16.mxu0 %v1211
    %1945 = vmatpush1.bf16.msra.mxu0 %v1210
    %1946 = vmatprep.subr.bf16.mxu0 %v1219
    %1947 = vmatpush1.bf16.msra.mxu0 %v1218
    %1948 = vmatprep.subr.bf16.mxu0 %v1227
    %1949 = vmatpush1.bf16.msra.mxu0 %v1226
    %1950 = vmatprep.subr.bf16.mxu0 %v1235
    %1951 = vmatpush1.bf16.msra.mxu0 %v1234
    %1952 = vmatprep.subr.bf16.mxu0 %v1243
    %1953 = vmatpush1.bf16.msra.mxu0 %v1242
    %1954 = vmatprep.subr.bf16.mxu0 %v1251
    %1955 = vmatpush1.bf16.msra.mxu0 %v1250
    %1956 = vmatprep.subr.bf16.mxu0 %v1259
    %1957 = vmatpush1.bf16.msra.mxu0 %v1258
    %1958 = vmatprep.subr.bf16.mxu0 %v1267
    %1959 = vmatpush1.bf16.msra.mxu0 %v1266
    %1960 = vmatprep.subr.bf16.mxu0 %v1275
    %1961 = vmatpush1.bf16.msra.mxu0 %v1274
    %1962 = vmatprep.subr.bf16.mxu0 %v1283
    %1963 = vmatpush1.bf16.msra.mxu0 %v1282
    %1964 = vmatprep.subr.bf16.mxu0 %v1291
    %1965 = vmatpush1.bf16.msra.mxu0 %v1290
    %1966 = vmatprep.mubr.bf16.mxu0 %v389
    %1967 = vmatmul.mubr.bf16.gmra.mrb[0].mxu0 %v388
    %v1968 = vpop.f32.mrb[0].mxu0
    %v1969 = vadd.f32 %v363, %v1968
    %v1970 = vpop.f32.mrb[0].mxu0
    %v1971 = vadd.f32 %v367, %v1970
    %v1972 = vpop.f32.mrb[0].mxu0
    %v1973 = vadd.f32 %v363, %v1972
    %v1974 = vpop.f32.mrb[0].mxu0
    %v1975 = vadd.f32 %v367, %v1974
    %1976 = vdwg.mxu0
    %1977 = vmatprep.subr.bf16.mxu0 %v1299
    %1978 = vmatpush1.bf16.msra.mxu0 %v1298
    %1979 = vmatprep.subr.bf16.mxu0 %v1307
    %1980 = vmatpush1.bf16.msra.mxu0 %v1306
    %1981 = vmatprep.subr.bf16.mxu0 %v1315
    %1982 = vmatpush1.bf16.msra.mxu0 %v1314
    %1983 = vmatprep.subr.bf16.mxu0 %v1323
    %1984 = vmatpush1.bf16.msra.mxu0 %v1322
    %1985 = vmatprep.subr.bf16.mxu0 %v1331
    %1986 = vmatpush1.bf16.msra.mxu0 %v1330
    %1987 = vmatprep.subr.bf16.mxu0 %v1339
    %1988 = vmatpush1.bf16.msra.mxu0 %v1338
    %1989 = vmatprep.subr.bf16.mxu0 %v1347
    %1990 = vmatpush1.bf16.msra.mxu0 %v1346
    %1991 = vmatprep.subr.bf16.mxu0 %v1355
    %1992 = vmatpush1.bf16.msra.mxu0 %v1354
    %1993 = vmatprep.subr.bf16.mxu0 %v1363
    %1994 = vmatpush1.bf16.msra.mxu0 %v1362
    %1995 = vmatprep.subr.bf16.mxu0 %v1371
    %1996 = vmatpush1.bf16.msra.mxu0 %v1370
    %1997 = vmatprep.subr.bf16.mxu0 %v1379
    %1998 = vmatpush1.bf16.msra.mxu0 %v1378
    %1999 = vmatprep.subr.bf16.mxu0 %v1387
    %2000 = vmatpush1.bf16.msra.mxu0 %v1386
    %2001 = vmatprep.subr.bf16.mxu0 %v1395
    %2002 = vmatpush1.bf16.msra.mxu0 %v1394
    %2003 = vmatprep.subr.bf16.mxu0 %v1403
    %2004 = vmatpush1.bf16.msra.mxu0 %v1402
    %2005 = vmatprep.subr.bf16.mxu0 %v1411
    %2006 = vmatpush1.bf16.msra.mxu0 %v1410
    %2007 = vmatprep.subr.bf16.mxu0 %v1419
    %2008 = vmatpush1.bf16.msra.mxu0 %v1418
    %2009 = vmatprep.mubr.bf16.mxu0 %v391
    %2010 = vmatmul.mubr.bf16.gmra.mrb[0].mxu0 %v390
    %v2011 = vpop.f32.mrb[0].mxu0
    %v2012 = vadd.f32 %v1969, %v2011
    %v2013 = vpop.f32.mrb[0].mxu0
    %v2014 = vadd.f32 %v1971, %v2013
    %v2015 = vpop.f32.mrb[0].mxu0
    %v2016 = vadd.f32 %v1973, %v2015
    %v2017 = vpop.f32.mrb[0].mxu0
    %v2018 = vadd.f32 %v1975, %v2017
    %2019 = vdwg.mxu0
    %v2020 = vmax.f32 %v1754, 0.0
    %v2021 = vmax.f32 %v1756, 0.0
    %v2022 = vmax.f32 %v1840, 0.0
    %v2023 = vmax.f32 %v1842, 0.0
    %v2024 = vmax.f32 %v1926, 0.0
    %v2025 = vmax.f32 %v1928, 0.0
    %v2026 = vmax.f32 %v2012, 0.0
    %v2027 = vmax.f32 %v2014, 0.0
    %v2028 = vmax.f32 %v1758, 0.0
    %v2029 = vmax.f32 %v1760, 0.0
    %v2030 = vmax.f32 %v1844, 0.0
    %v2031 = vmax.f32 %v1846, 0.0
    %v2032 = vmax.f32 %v1930, 0.0
    %v2033 = vmax.f32 %v1932, 0.0
    %v2034 = vmax.f32 %v2016, 0.0
    %v2035 = vmax.f32 %v2018, 0.0
    %v2036 = vpack.c.bf16 %v2028, %v2020
    %v2037 = vpack.c.bf16 %v2029, %v2021
    %v2038 = vpack.c.bf16 %v2030, %v2022
    %v2039 = vpack.c.bf16 %v2031, %v2023
    %v2040 = vpack.c.bf16 %v2032, %v2024
    %v2041 = vpack.c.bf16 %v2033, %v2025
    %v2042 = vpack.c.bf16 %v2034, %v2026
    %v2043 = vpack.c.bf16 %v2035, %v2027
    %v2044 = vld [vmem:[#allocation8] sm:$0xff]
    %v2045 = vld [vmem:[#allocation8 + $0x8] sm:$0xff]
    %v2046 = vld [vmem:[#allocation8 + $0x10] sm:$0xff]
    %v2047 = vld [vmem:[#allocation8 + $0x18] sm:$0xff]
    %v2048 = vld [vmem:[#allocation8 + $0x20] sm:$0xff]
    %v2049 = vld [vmem:[#allocation8 + $0x28] sm:$0xff]
    %v2050 = vld [vmem:[#allocation8 + $0x30] sm:$0xff]
    %v2051 = vld [vmem:[#allocation8 + $0x38] sm:$0xff]
    %v2052 = vld [vmem:[#allocation8 + $0x40] sm:$0xff]
    %v2053 = vld [vmem:[#allocation8 + $0x48] sm:$0xff]
    %v2054 = vld [vmem:[#allocation8 + $0x50] sm:$0xff]
    %v2055 = vld [vmem:[#allocation8 + $0x58] sm:$0xff]
    %v2056 = vld [vmem:[#allocation8 + $0x60] sm:$0xff]
    %v2057 = vld [vmem:[#allocation8 + $0x68] sm:$0xff]
    %v2058 = vld [vmem:[#allocation8 + $0x70] sm:$0xff]
    %v2059 = vld [vmem:[#allocation8 + $0x78] sm:$0xff]
    %v2060 = vld [vmem:[#allocation8 + $0x80] sm:$0xff]
    %v2061 = vld [vmem:[#allocation8 + $0x88] sm:$0xff]
    %v2062 = vld [vmem:[#allocation8 + $0x90] sm:$0xff]
    %v2063 = vld [vmem:[#allocation8 + $0x98] sm:$0xff]
    %v2064 = vld [vmem:[#allocation8 + $0xa0] sm:$0xff]
    %v2065 = vld [vmem:[#allocation8 + $0xa8] sm:$0xff]
    %v2066 = vld [vmem:[#allocation8 + $0xb0] sm:$0xff]
    %v2067 = vld [vmem:[#allocation8 + $0xb8] sm:$0xff]
    %v2068 = vld [vmem:[#allocation8 + $0xc0] sm:$0xff]
    %v2069 = vld [vmem:[#allocation8 + $0xc8] sm:$0xff]
    %v2070 = vld [vmem:[#allocation8 + $0xd0] sm:$0xff]
    %v2071 = vld [vmem:[#allocation8 + $0xd8] sm:$0xff]
    %v2072 = vld [vmem:[#allocation8 + $0xe0] sm:$0xff]
    %v2073 = vld [vmem:[#allocation8 + $0xe8] sm:$0xff]
    %v2074 = vld [vmem:[#allocation8 + $0xf0] sm:$0xff]
    %v2075 = vld [vmem:[#allocation8 + $0xf8] sm:$0xff]
    %v2076 = vld [vmem:[#allocation8 + $0x100] sm:$0xff]
    %v2077 = vld [vmem:[#allocation8 + $0x108] sm:$0xff]
    %v2078 = vld [vmem:[#allocation8 + $0x110] sm:$0xff]
    %v2079 = vld [vmem:[#allocation8 + $0x118] sm:$0xff]
    %v2080 = vld [vmem:[#allocation8 + $0x120] sm:$0xff]
    %v2081 = vld [vmem:[#allocation8 + $0x128] sm:$0xff]
    %v2082 = vld [vmem:[#allocation8 + $0x130] sm:$0xff]
    %v2083 = vld [vmem:[#allocation8 + $0x138] sm:$0xff]
    %v2084 = vld [vmem:[#allocation8 + $0x140] sm:$0xff]
    %v2085 = vld [vmem:[#allocation8 + $0x148] sm:$0xff]
    %v2086 = vld [vmem:[#allocation8 + $0x150] sm:$0xff]
    %v2087 = vld [vmem:[#allocation8 + $0x158] sm:$0xff]
    %v2088 = vld [vmem:[#allocation8 + $0x160] sm:$0xff]
    %v2089 = vld [vmem:[#allocation8 + $0x168] sm:$0xff]
    %v2090 = vld [vmem:[#allocation8 + $0x170] sm:$0xff]
    %v2091 = vld [vmem:[#allocation8 + $0x178] sm:$0xff]
    %v2092 = vld [vmem:[#allocation8 + $0x180] sm:$0xff]
    %v2093 = vld [vmem:[#allocation8 + $0x188] sm:$0xff]
    %v2094 = vld [vmem:[#allocation8 + $0x190] sm:$0xff]
    %v2095 = vld [vmem:[#allocation8 + $0x198] sm:$0xff]
    %v2096 = vld [vmem:[#allocation8 + $0x1a0] sm:$0xff]
    %v2097 = vld [vmem:[#allocation8 + $0x1a8] sm:$0xff]
    %v2098 = vld [vmem:[#allocation8 + $0x1b0] sm:$0xff]
    %v2099 = vld [vmem:[#allocation8 + $0x1b8] sm:$0xff]
    %v2100 = vld [vmem:[#allocation8 + $0x1c0] sm:$0xff]
    %v2101 = vld [vmem:[#allocation8 + $0x1c8] sm:$0xff]
    %v2102 = vld [vmem:[#allocation8 + $0x1d0] sm:$0xff]
    %v2103 = vld [vmem:[#allocation8 + $0x1d8] sm:$0xff]
    %v2104 = vld [vmem:[#allocation8 + $0x1e0] sm:$0xff]
    %v2105 = vld [vmem:[#allocation8 + $0x1e8] sm:$0xff]
    %v2106 = vld [vmem:[#allocation8 + $0x1f0] sm:$0xff]
    %v2107 = vld [vmem:[#allocation8 + $0x1f8] sm:$0xff]
    %v2108 = vld [vmem:[#allocation8 + $0x200] sm:$0xff]
    %v2109 = vld [vmem:[#allocation8 + $0x208] sm:$0xff]
    %v2110 = vld [vmem:[#allocation8 + $0x210] sm:$0xff]
    %v2111 = vld [vmem:[#allocation8 + $0x218] sm:$0xff]
    %v2112 = vld [vmem:[#allocation8 + $0x220] sm:$0xff]
    %v2113 = vld [vmem:[#allocation8 + $0x228] sm:$0xff]
    %v2114 = vld [vmem:[#allocation8 + $0x230] sm:$0xff]
    %v2115 = vld [vmem:[#allocation8 + $0x238] sm:$0xff]
    %v2116 = vld [vmem:[#allocation8 + $0x240] sm:$0xff]
    %v2117 = vld [vmem:[#allocation8 + $0x248] sm:$0xff]
    %v2118 = vld [vmem:[#allocation8 + $0x250] sm:$0xff]
    %v2119 = vld [vmem:[#allocation8 + $0x258] sm:$0xff]
    %v2120 = vld [vmem:[#allocation8 + $0x260] sm:$0xff]
    %v2121 = vld [vmem:[#allocation8 + $0x268] sm:$0xff]
    %v2122 = vld [vmem:[#allocation8 + $0x270] sm:$0xff]
    %v2123 = vld [vmem:[#allocation8 + $0x278] sm:$0xff]
    %v2124 = vld [vmem:[#allocation8 + $0x280] sm:$0xff]
    %v2125 = vld [vmem:[#allocation8 + $0x288] sm:$0xff]
    %v2126 = vld [vmem:[#allocation8 + $0x290] sm:$0xff]
    %v2127 = vld [vmem:[#allocation8 + $0x298] sm:$0xff]
    %v2128 = vld [vmem:[#allocation8 + $0x2a0] sm:$0xff]
    %v2129 = vld [vmem:[#allocation8 + $0x2a8] sm:$0xff]
    %v2130 = vld [vmem:[#allocation8 + $0x2b0] sm:$0xff]
    %v2131 = vld [vmem:[#allocation8 + $0x2b8] sm:$0xff]
    %v2132 = vld [vmem:[#allocation8 + $0x2c0] sm:$0xff]
    %v2133 = vld [vmem:[#allocation8 + $0x2c8] sm:$0xff]
    %v2134 = vld [vmem:[#allocation8 + $0x2d0] sm:$0xff]
    %v2135 = vld [vmem:[#allocation8 + $0x2d8] sm:$0xff]
    %v2136 = vld [vmem:[#allocation8 + $0x2e0] sm:$0xff]
    %v2137 = vld [vmem:[#allocation8 + $0x2e8] sm:$0xff]
    %v2138 = vld [vmem:[#allocation8 + $0x2f0] sm:$0xff]
    %v2139 = vld [vmem:[#allocation8 + $0x2f8] sm:$0xff]
    %v2140 = vld [vmem:[#allocation8 + $0x300] sm:$0xff]
    %v2141 = vld [vmem:[#allocation8 + $0x308] sm:$0xff]
    %v2142 = vld [vmem:[#allocation8 + $0x310] sm:$0xff]
    %v2143 = vld [vmem:[#allocation8 + $0x318] sm:$0xff]
    %v2144 = vld [vmem:[#allocation8 + $0x320] sm:$0xff]
    %v2145 = vld [vmem:[#allocation8 + $0x328] sm:$0xff]
    %v2146 = vld [vmem:[#allocation8 + $0x330] sm:$0xff]
    %v2147 = vld [vmem:[#allocation8 + $0x338] sm:$0xff]
    %v2148 = vld [vmem:[#allocation8 + $0x340] sm:$0xff]
    %v2149 = vld [vmem:[#allocation8 + $0x348] sm:$0xff]
    %v2150 = vld [vmem:[#allocation8 + $0x350] sm:$0xff]
    %v2151 = vld [vmem:[#allocation8 + $0x358] sm:$0xff]
    %v2152 = vld [vmem:[#allocation8 + $0x360] sm:$0xff]
    %v2153 = vld [vmem:[#allocation8 + $0x368] sm:$0xff]
    %v2154 = vld [vmem:[#allocation8 + $0x370] sm:$0xff]
    %v2155 = vld [vmem:[#allocation8 + $0x378] sm:$0xff]
    %v2156 = vld [vmem:[#allocation8 + $0x380] sm:$0xff]
    %v2157 = vld [vmem:[#allocation8 + $0x388] sm:$0xff]
    %v2158 = vld [vmem:[#allocation8 + $0x390] sm:$0xff]
    %v2159 = vld [vmem:[#allocation8 + $0x398] sm:$0xff]
    %v2160 = vld [vmem:[#allocation8 + $0x3a0] sm:$0xff]
    %v2161 = vld [vmem:[#allocation8 + $0x3a8] sm:$0xff]
    %v2162 = vld [vmem:[#allocation8 + $0x3b0] sm:$0xff]
    %v2163 = vld [vmem:[#allocation8 + $0x3b8] sm:$0xff]
    %v2164 = vld [vmem:[#allocation8 + $0x3c0] sm:$0xff]
    %v2165 = vld [vmem:[#allocation8 + $0x3c8] sm:$0xff]
    %v2166 = vld [vmem:[#allocation8 + $0x3d0] sm:$0xff]
    %v2167 = vld [vmem:[#allocation8 + $0x3d8] sm:$0xff]
    %v2168 = vld [vmem:[#allocation8 + $0x3e0] sm:$0xff]
    %v2169 = vld [vmem:[#allocation8 + $0x3e8] sm:$0xff]
    %v2170 = vld [vmem:[#allocation8 + $0x3f0] sm:$0xff]
    %v2171 = vld [vmem:[#allocation8 + $0x3f8] sm:$0xff]
    %v2172 = vld [vmem:[%s4] sm:$0x3]
    %v2174 = vlaneseq
    %v2175 = vshrl.u32 %v2174, 7
    %v2176 = vsub.s32 0, %v2175
    %v2177 = vrot.slane %v2172, %v2176
    %v2178 = vlaneseq
    %v2179 = vshrl.u32 %v2178, 7
    %v2180 = vsub.s32 1, %v2179
    %v2181 = vrot.slane %v2172, %v2180
    %v2312 = vunpack.c.l.b16 %v2044
    %v2313 = vunpack.c.h.b16 %v2044
    %v2314 = vunpack.c.l.b16 %v2045
    %v2315 = vunpack.c.h.b16 %v2045
    %v2316 = vunpack.c.l.b16 %v2046
    %v2317 = vunpack.c.h.b16 %v2046
    %v2318 = vunpack.c.l.b16 %v2047
    %v2319 = vunpack.c.h.b16 %v2047
    %v2320 = vunpack.c.l.b16 %v2048
    %v2321 = vunpack.c.h.b16 %v2048
    %v2322 = vunpack.c.l.b16 %v2049
    %v2323 = vunpack.c.h.b16 %v2049
    %v2324 = vunpack.c.l.b16 %v2050
    %v2325 = vunpack.c.h.b16 %v2050
    %v2326 = vunpack.c.l.b16 %v2051
    %v2327 = vunpack.c.h.b16 %v2051
    %v2328 = vunpack.c.l.b16 %v2052
    %v2329 = vunpack.c.h.b16 %v2052
    %v2330 = vunpack.c.l.b16 %v2053
    %v2331 = vunpack.c.h.b16 %v2053
    %v2332 = vunpack.c.l.b16 %v2054
    %v2333 = vunpack.c.h.b16 %v2054
    %v2334 = vunpack.c.l.b16 %v2055
    %v2335 = vunpack.c.h.b16 %v2055
    %v2336 = vunpack.c.l.b16 %v2056
    %v2337 = vunpack.c.h.b16 %v2056
    %v2338 = vunpack.c.l.b16 %v2057
    %v2339 = vunpack.c.h.b16 %v2057
    %v2340 = vunpack.c.l.b16 %v2058
    %v2341 = vunpack.c.h.b16 %v2058
    %v2342 = vunpack.c.l.b16 %v2059
    %v2343 = vunpack.c.h.b16 %v2059
    %v2344 = vunpack.c.l.b16 %v2060
    %v2345 = vunpack.c.h.b16 %v2060
    %v2346 = vunpack.c.l.b16 %v2061
    %v2347 = vunpack.c.h.b16 %v2061
    %v2348 = vunpack.c.l.b16 %v2062
    %v2349 = vunpack.c.h.b16 %v2062
    %v2350 = vunpack.c.l.b16 %v2063
    %v2351 = vunpack.c.h.b16 %v2063
    %v2352 = vunpack.c.l.b16 %v2064
    %v2353 = vunpack.c.h.b16 %v2064
    %v2354 = vunpack.c.l.b16 %v2065
    %v2355 = vunpack.c.h.b16 %v2065
    %v2356 = vunpack.c.l.b16 %v2066
    %v2357 = vunpack.c.h.b16 %v2066
    %v2358 = vunpack.c.l.b16 %v2067
    %v2359 = vunpack.c.h.b16 %v2067
    %v2360 = vunpack.c.l.b16 %v2068
    %v2361 = vunpack.c.h.b16 %v2068
    %v2362 = vunpack.c.l.b16 %v2069
    %v2363 = vunpack.c.h.b16 %v2069
    %v2364 = vunpack.c.l.b16 %v2070
    %v2365 = vunpack.c.h.b16 %v2070
    %v2366 = vunpack.c.l.b16 %v2071
    %v2367 = vunpack.c.h.b16 %v2071
    %v2368 = vunpack.c.l.b16 %v2072
    %v2369 = vunpack.c.h.b16 %v2072
    %v2370 = vunpack.c.l.b16 %v2073
    %v2371 = vunpack.c.h.b16 %v2073
    %v2372 = vunpack.c.l.b16 %v2074
    %v2373 = vunpack.c.h.b16 %v2074
    %v2374 = vunpack.c.l.b16 %v2075
    %v2375 = vunpack.c.h.b16 %v2075
    %v2376 = vunpack.c.l.b16 %v2076
    %v2377 = vunpack.c.h.b16 %v2076
    %v2378 = vunpack.c.l.b16 %v2077
    %v2379 = vunpack.c.h.b16 %v2077
    %v2380 = vunpack.c.l.b16 %v2078
    %v2381 = vunpack.c.h.b16 %v2078
    %v2382 = vunpack.c.l.b16 %v2079
    %v2383 = vunpack.c.h.b16 %v2079
    %v2384 = vunpack.c.l.b16 %v2080
    %v2385 = vunpack.c.h.b16 %v2080
    %v2386 = vunpack.c.l.b16 %v2081
    %v2387 = vunpack.c.h.b16 %v2081
    %v2388 = vunpack.c.l.b16 %v2082
    %v2389 = vunpack.c.h.b16 %v2082
    %v2390 = vunpack.c.l.b16 %v2083
    %v2391 = vunpack.c.h.b16 %v2083
    %v2392 = vunpack.c.l.b16 %v2084
    %v2393 = vunpack.c.h.b16 %v2084
    %v2394 = vunpack.c.l.b16 %v2085
    %v2395 = vunpack.c.h.b16 %v2085
    %v2396 = vunpack.c.l.b16 %v2086
    %v2397 = vunpack.c.h.b16 %v2086
    %v2398 = vunpack.c.l.b16 %v2087
    %v2399 = vunpack.c.h.b16 %v2087
    %v2400 = vunpack.c.l.b16 %v2088
    %v2401 = vunpack.c.h.b16 %v2088
    %v2402 = vunpack.c.l.b16 %v2089
    %v2403 = vunpack.c.h.b16 %v2089
    %v2404 = vunpack.c.l.b16 %v2090
    %v2405 = vunpack.c.h.b16 %v2090
    %v2406 = vunpack.c.l.b16 %v2091
    %v2407 = vunpack.c.h.b16 %v2091
    %v2408 = vunpack.c.l.b16 %v2092
    %v2409 = vunpack.c.h.b16 %v2092
    %v2410 = vunpack.c.l.b16 %v2093
    %v2411 = vunpack.c.h.b16 %v2093
    %v2412 = vunpack.c.l.b16 %v2094
    %v2413 = vunpack.c.h.b16 %v2094
    %v2414 = vunpack.c.l.b16 %v2095
    %v2415 = vunpack.c.h.b16 %v2095
    %v2416 = vunpack.c.l.b16 %v2096
    %v2417 = vunpack.c.h.b16 %v2096
    %v2418 = vunpack.c.l.b16 %v2097
    %v2419 = vunpack.c.h.b16 %v2097
    %v2420 = vunpack.c.l.b16 %v2098
    %v2421 = vunpack.c.h.b16 %v2098
    %v2422 = vunpack.c.l.b16 %v2099
    %v2423 = vunpack.c.h.b16 %v2099
    %v2424 = vunpack.c.l.b16 %v2100
    %v2425 = vunpack.c.h.b16 %v2100
    %v2426 = vunpack.c.l.b16 %v2101
    %v2427 = vunpack.c.h.b16 %v2101
    %v2428 = vunpack.c.l.b16 %v2102
    %v2429 = vunpack.c.h.b16 %v2102
    %v2430 = vunpack.c.l.b16 %v2103
    %v2431 = vunpack.c.h.b16 %v2103
    %v2432 = vunpack.c.l.b16 %v2104
    %v2433 = vunpack.c.h.b16 %v2104
    %v2434 = vunpack.c.l.b16 %v2105
    %v2435 = vunpack.c.h.b16 %v2105
    %v2436 = vunpack.c.l.b16 %v2106
    %v2437 = vunpack.c.h.b16 %v2106
    %v2438 = vunpack.c.l.b16 %v2107
    %v2439 = vunpack.c.h.b16 %v2107
    %v2440 = vunpack.c.l.b16 %v2108
    %v2441 = vunpack.c.h.b16 %v2108
    %v2442 = vunpack.c.l.b16 %v2109
    %v2443 = vunpack.c.h.b16 %v2109
    %v2444 = vunpack.c.l.b16 %v2110
    %v2445 = vunpack.c.h.b16 %v2110
    %v2446 = vunpack.c.l.b16 %v2111
    %v2447 = vunpack.c.h.b16 %v2111
    %v2448 = vunpack.c.l.b16 %v2112
    %v2449 = vunpack.c.h.b16 %v2112
    %v2450 = vunpack.c.l.b16 %v2113
    %v2451 = vunpack.c.h.b16 %v2113
    %v2452 = vunpack.c.l.b16 %v2114
    %v2453 = vunpack.c.h.b16 %v2114
    %v2454 = vunpack.c.l.b16 %v2115
    %v2455 = vunpack.c.h.b16 %v2115
    %v2456 = vunpack.c.l.b16 %v2116
    %v2457 = vunpack.c.h.b16 %v2116
    %v2458 = vunpack.c.l.b16 %v2117
    %v2459 = vunpack.c.h.b16 %v2117
    %v2460 = vunpack.c.l.b16 %v2118
    %v2461 = vunpack.c.h.b16 %v2118
    %v2462 = vunpack.c.l.b16 %v2119
    %v2463 = vunpack.c.h.b16 %v2119
    %v2464 = vunpack.c.l.b16 %v2120
    %v2465 = vunpack.c.h.b16 %v2120
    %v2466 = vunpack.c.l.b16 %v2121
    %v2467 = vunpack.c.h.b16 %v2121
    %v2468 = vunpack.c.l.b16 %v2122
    %v2469 = vunpack.c.h.b16 %v2122
    %v2470 = vunpack.c.l.b16 %v2123
    %v2471 = vunpack.c.h.b16 %v2123
    %v2472 = vunpack.c.l.b16 %v2124
    %v2473 = vunpack.c.h.b16 %v2124
    %v2474 = vunpack.c.l.b16 %v2125
    %v2475 = vunpack.c.h.b16 %v2125
    %v2476 = vunpack.c.l.b16 %v2126
    %v2477 = vunpack.c.h.b16 %v2126
    %v2478 = vunpack.c.l.b16 %v2127
    %v2479 = vunpack.c.h.b16 %v2127
    %v2480 = vunpack.c.l.b16 %v2128
    %v2481 = vunpack.c.h.b16 %v2128
    %v2482 = vunpack.c.l.b16 %v2129
    %v2483 = vunpack.c.h.b16 %v2129
    %v2484 = vunpack.c.l.b16 %v2130
    %v2485 = vunpack.c.h.b16 %v2130
    %v2486 = vunpack.c.l.b16 %v2131
    %v2487 = vunpack.c.h.b16 %v2131
    %v2488 = vunpack.c.l.b16 %v2132
    %v2489 = vunpack.c.h.b16 %v2132
    %v2490 = vunpack.c.l.b16 %v2133
    %v2491 = vunpack.c.h.b16 %v2133
    %v2492 = vunpack.c.l.b16 %v2134
    %v2493 = vunpack.c.h.b16 %v2134
    %v2494 = vunpack.c.l.b16 %v2135
    %v2495 = vunpack.c.h.b16 %v2135
    %v2496 = vunpack.c.l.b16 %v2136
    %v2497 = vunpack.c.h.b16 %v2136
    %v2498 = vunpack.c.l.b16 %v2137
    %v2499 = vunpack.c.h.b16 %v2137
    %v2500 = vunpack.c.l.b16 %v2138
    %v2501 = vunpack.c.h.b16 %v2138
    %v2502 = vunpack.c.l.b16 %v2139
    %v2503 = vunpack.c.h.b16 %v2139
    %v2504 = vunpack.c.l.b16 %v2140
    %v2505 = vunpack.c.h.b16 %v2140
    %v2506 = vunpack.c.l.b16 %v2141
    %v2507 = vunpack.c.h.b16 %v2141
    %v2508 = vunpack.c.l.b16 %v2142
    %v2509 = vunpack.c.h.b16 %v2142
    %v2510 = vunpack.c.l.b16 %v2143
    %v2511 = vunpack.c.h.b16 %v2143
    %v2512 = vunpack.c.l.b16 %v2144
    %v2513 = vunpack.c.h.b16 %v2144
    %v2514 = vunpack.c.l.b16 %v2145
    %v2515 = vunpack.c.h.b16 %v2145
    %v2516 = vunpack.c.l.b16 %v2146
    %v2517 = vunpack.c.h.b16 %v2146
    %v2518 = vunpack.c.l.b16 %v2147
    %v2519 = vunpack.c.h.b16 %v2147
    %v2520 = vunpack.c.l.b16 %v2148
    %v2521 = vunpack.c.h.b16 %v2148
    %v2522 = vunpack.c.l.b16 %v2149
    %v2523 = vunpack.c.h.b16 %v2149
    %v2524 = vunpack.c.l.b16 %v2150
    %v2525 = vunpack.c.h.b16 %v2150
    %v2526 = vunpack.c.l.b16 %v2151
    %v2527 = vunpack.c.h.b16 %v2151
    %v2528 = vunpack.c.l.b16 %v2152
    %v2529 = vunpack.c.h.b16 %v2152
    %v2530 = vunpack.c.l.b16 %v2153
    %v2531 = vunpack.c.h.b16 %v2153
    %v2532 = vunpack.c.l.b16 %v2154
    %v2533 = vunpack.c.h.b16 %v2154
    %v2534 = vunpack.c.l.b16 %v2155
    %v2535 = vunpack.c.h.b16 %v2155
    %v2536 = vunpack.c.l.b16 %v2156
    %v2537 = vunpack.c.h.b16 %v2156
    %v2538 = vunpack.c.l.b16 %v2157
    %v2539 = vunpack.c.h.b16 %v2157
    %v2540 = vunpack.c.l.b16 %v2158
    %v2541 = vunpack.c.h.b16 %v2158
    %v2542 = vunpack.c.l.b16 %v2159
    %v2543 = vunpack.c.h.b16 %v2159
    %v2544 = vunpack.c.l.b16 %v2160
    %v2545 = vunpack.c.h.b16 %v2160
    %v2546 = vunpack.c.l.b16 %v2161
    %v2547 = vunpack.c.h.b16 %v2161
    %v2548 = vunpack.c.l.b16 %v2162
    %v2549 = vunpack.c.h.b16 %v2162
    %v2550 = vunpack.c.l.b16 %v2163
    %v2551 = vunpack.c.h.b16 %v2163
    %v2552 = vunpack.c.l.b16 %v2164
    %v2553 = vunpack.c.h.b16 %v2164
    %v2554 = vunpack.c.l.b16 %v2165
    %v2555 = vunpack.c.h.b16 %v2165
    %v2556 = vunpack.c.l.b16 %v2166
    %v2557 = vunpack.c.h.b16 %v2166
    %v2558 = vunpack.c.l.b16 %v2167
    %v2559 = vunpack.c.h.b16 %v2167
    %v2560 = vunpack.c.l.b16 %v2168
    %v2561 = vunpack.c.h.b16 %v2168
    %v2562 = vunpack.c.l.b16 %v2169
    %v2563 = vunpack.c.h.b16 %v2169
    %v2564 = vunpack.c.l.b16 %v2170
    %v2565 = vunpack.c.h.b16 %v2170
    %v2566 = vunpack.c.l.b16 %v2171
    %v2567 = vunpack.c.h.b16 %v2171
    %v2568 = vpack.c.b16 %v2314, %v2312
    %v2569 = vpack.c.b16 %v2315, %v2313
    %v2570 = vpack.c.b16 %v2318, %v2316
    %v2571 = vpack.c.b16 %v2319, %v2317
    %v2572 = vpack.c.b16 %v2322, %v2320
    %v2573 = vpack.c.b16 %v2323, %v2321
    %v2574 = vpack.c.b16 %v2326, %v2324
    %v2575 = vpack.c.b16 %v2327, %v2325
    %v2576 = vpack.c.b16 %v2330, %v2328
    %v2577 = vpack.c.b16 %v2331, %v2329
    %v2578 = vpack.c.b16 %v2334, %v2332
    %v2579 = vpack.c.b16 %v2335, %v2333
    %v2580 = vpack.c.b16 %v2338, %v2336
    %v2581 = vpack.c.b16 %v2339, %v2337
    %v2582 = vpack.c.b16 %v2342, %v2340
    %v2583 = vpack.c.b16 %v2343, %v2341
    %v2584 = vpack.c.b16 %v2346, %v2344
    %v2585 = vpack.c.b16 %v2347, %v2345
    %v2586 = vpack.c.b16 %v2350, %v2348
    %v2587 = vpack.c.b16 %v2351, %v2349
    %v2588 = vpack.c.b16 %v2354, %v2352
    %v2589 = vpack.c.b16 %v2355, %v2353
    %v2590 = vpack.c.b16 %v2358, %v2356
    %v2591 = vpack.c.b16 %v2359, %v2357
    %v2592 = vpack.c.b16 %v2362, %v2360
    %v2593 = vpack.c.b16 %v2363, %v2361
    %v2594 = vpack.c.b16 %v2366, %v2364
    %v2595 = vpack.c.b16 %v2367, %v2365
    %v2596 = vpack.c.b16 %v2370, %v2368
    %v2597 = vpack.c.b16 %v2371, %v2369
    %v2598 = vpack.c.b16 %v2374, %v2372
    %v2599 = vpack.c.b16 %v2375, %v2373
    %v2600 = vpack.c.b16 %v2378, %v2376
    %v2601 = vpack.c.b16 %v2379, %v2377
    %v2602 = vpack.c.b16 %v2382, %v2380
    %v2603 = vpack.c.b16 %v2383, %v2381
    %v2604 = vpack.c.b16 %v2386, %v2384
    %v2605 = vpack.c.b16 %v2387, %v2385
    %v2606 = vpack.c.b16 %v2390, %v2388
    %v2607 = vpack.c.b16 %v2391, %v2389
    %v2608 = vpack.c.b16 %v2394, %v2392
    %v2609 = vpack.c.b16 %v2395, %v2393
    %v2610 = vpack.c.b16 %v2398, %v2396
    %v2611 = vpack.c.b16 %v2399, %v2397
    %v2612 = vpack.c.b16 %v2402, %v2400
    %v2613 = vpack.c.b16 %v2403, %v2401
    %v2614 = vpack.c.b16 %v2406, %v2404
    %v2615 = vpack.c.b16 %v2407, %v2405
    %v2616 = vpack.c.b16 %v2410, %v2408
    %v2617 = vpack.c.b16 %v2411, %v2409
    %v2618 = vpack.c.b16 %v2414, %v2412
    %v2619 = vpack.c.b16 %v2415, %v2413
    %v2620 = vpack.c.b16 %v2418, %v2416
    %v2621 = vpack.c.b16 %v2419, %v2417
    %v2622 = vpack.c.b16 %v2422, %v2420
    %v2623 = vpack.c.b16 %v2423, %v2421
    %v2624 = vpack.c.b16 %v2426, %v2424
    %v2625 = vpack.c.b16 %v2427, %v2425
    %v2626 = vpack.c.b16 %v2430, %v2428
    %v2627 = vpack.c.b16 %v2431, %v2429
    %v2628 = vpack.c.b16 %v2434, %v2432
    %v2629 = vpack.c.b16 %v2435, %v2433
    %v2630 = vpack.c.b16 %v2438, %v2436
    %v2631 = vpack.c.b16 %v2439, %v2437
    %v2632 = vpack.c.b16 %v2442, %v2440
    %v2633 = vpack.c.b16 %v2443, %v2441
    %v2634 = vpack.c.b16 %v2446, %v2444
    %v2635 = vpack.c.b16 %v2447, %v2445
    %v2636 = vpack.c.b16 %v2450, %v2448
    %v2637 = vpack.c.b16 %v2451, %v2449
    %v2638 = vpack.c.b16 %v2454, %v2452
    %v2639 = vpack.c.b16 %v2455, %v2453
    %v2640 = vpack.c.b16 %v2458, %v2456
    %v2641 = vpack.c.b16 %v2459, %v2457
    %v2642 = vpack.c.b16 %v2462, %v2460
    %v2643 = vpack.c.b16 %v2463, %v2461
    %v2644 = vpack.c.b16 %v2466, %v2464
    %v2645 = vpack.c.b16 %v2467, %v2465
    %v2646 = vpack.c.b16 %v2470, %v2468
    %v2647 = vpack.c.b16 %v2471, %v2469
    %v2648 = vpack.c.b16 %v2474, %v2472
    %v2649 = vpack.c.b16 %v2475, %v2473
    %v2650 = vpack.c.b16 %v2478, %v2476
    %v2651 = vpack.c.b16 %v2479, %v2477
    %v2652 = vpack.c.b16 %v2482, %v2480
    %v2653 = vpack.c.b16 %v2483, %v2481
    %v2654 = vpack.c.b16 %v2486, %v2484
    %v2655 = vpack.c.b16 %v2487, %v2485
    %v2656 = vpack.c.b16 %v2490, %v2488
    %v2657 = vpack.c.b16 %v2491, %v2489
    %v2658 = vpack.c.b16 %v2494, %v2492
    %v2659 = vpack.c.b16 %v2495, %v2493
    %v2660 = vpack.c.b16 %v2498, %v2496
    %v2661 = vpack.c.b16 %v2499, %v2497
    %v2662 = vpack.c.b16 %v2502, %v2500
    %v2663 = vpack.c.b16 %v2503, %v2501
    %v2664 = vpack.c.b16 %v2506, %v2504
    %v2665 = vpack.c.b16 %v2507, %v2505
    %v2666 = vpack.c.b16 %v2510, %v2508
    %v2667 = vpack.c.b16 %v2511, %v2509
    %v2668 = vpack.c.b16 %v2514, %v2512
    %v2669 = vpack.c.b16 %v2515, %v2513
    %v2670 = vpack.c.b16 %v2518, %v2516
    %v2671 = vpack.c.b16 %v2519, %v2517
    %v2672 = vpack.c.b16 %v2522, %v2520
    %v2673 = vpack.c.b16 %v2523, %v2521
    %v2674 = vpack.c.b16 %v2526, %v2524
    %v2675 = vpack.c.b16 %v2527, %v2525
    %v2676 = vpack.c.b16 %v2530, %v2528
    %v2677 = vpack.c.b16 %v2531, %v2529
    %v2678 = vpack.c.b16 %v2534, %v2532
    %v2679 = vpack.c.b16 %v2535, %v2533
    %v2680 = vpack.c.b16 %v2538, %v2536
    %v2681 = vpack.c.b16 %v2539, %v2537
    %v2682 = vpack.c.b16 %v2542, %v2540
    %v2683 = vpack.c.b16 %v2543, %v2541
    %v2684 = vpack.c.b16 %v2546, %v2544
    %v2685 = vpack.c.b16 %v2547, %v2545
    %v2686 = vpack.c.b16 %v2550, %v2548
    %v2687 = vpack.c.b16 %v2551, %v2549
    %v2688 = vpack.c.b16 %v2554, %v2552
    %v2689 = vpack.c.b16 %v2555, %v2553
    %v2690 = vpack.c.b16 %v2558, %v2556
    %v2691 = vpack.c.b16 %v2559, %v2557
    %v2692 = vpack.c.b16 %v2562, %v2560
    %v2693 = vpack.c.b16 %v2563, %v2561
    %v2694 = vpack.c.b16 %v2566, %v2564
    %v2695 = vpack.c.b16 %v2567, %v2565
    %2824 = vmatprep.subr.bf16.mxu0 %v2569
    %2825 = vmatpush1.bf16.msra.mxu0 %v2568
    %2826 = vmatprep.subr.bf16.mxu0 %v2571
    %2827 = vmatpush1.bf16.msra.mxu0 %v2570
    %2828 = vmatprep.subr.bf16.mxu0 %v2573
    %2829 = vmatpush1.bf16.msra.mxu0 %v2572
    %2830 = vmatprep.subr.bf16.mxu0 %v2575
    %2831 = vmatpush1.bf16.msra.mxu0 %v2574
    %2832 = vmatprep.subr.bf16.mxu0 %v2577
    %2833 = vmatpush1.bf16.msra.mxu0 %v2576
    %2834 = vmatprep.subr.bf16.mxu0 %v2579
    %2835 = vmatpush1.bf16.msra.mxu0 %v2578
    %2836 = vmatprep.subr.bf16.mxu0 %v2581
    %2837 = vmatpush1.bf16.msra.mxu0 %v2580
    %2838 = vmatprep.subr.bf16.mxu0 %v2583
    %2839 = vmatpush1.bf16.msra.mxu0 %v2582
    %2840 = vmatprep.subr.bf16.mxu0 %v2585
    %2841 = vmatpush1.bf16.msra.mxu0 %v2584
    %2842 = vmatprep.subr.bf16.mxu0 %v2587
    %2843 = vmatpush1.bf16.msra.mxu0 %v2586
    %2844 = vmatprep.subr.bf16.mxu0 %v2589
    %2845 = vmatpush1.bf16.msra.mxu0 %v2588
    %2846 = vmatprep.subr.bf16.mxu0 %v2591
    %2847 = vmatpush1.bf16.msra.mxu0 %v2590
    %2848 = vmatprep.subr.bf16.mxu0 %v2593
    %2849 = vmatpush1.bf16.msra.mxu0 %v2592
    %2850 = vmatprep.subr.bf16.mxu0 %v2595
    %2851 = vmatpush1.bf16.msra.mxu0 %v2594
    %2852 = vmatprep.subr.bf16.mxu0 %v2597
    %2853 = vmatpush1.bf16.msra.mxu0 %v2596
    %2854 = vmatprep.subr.bf16.mxu0 %v2599
    %2855 = vmatpush1.bf16.msra.mxu0 %v2598
    %2856 = vmatprep.mubr.bf16.mxu0 %v2037
    %2857 = vmatmul.mubr.bf16.gmra.mrb[0].mxu0 %v2036
    %v2858 = vpop.f32.mrb[0].mxu0
    %v2859 = vadd.f32 %v2177, %v2858
    %v2860 = vpop.f32.mrb[0].mxu0
    %v2861 = vadd.f32 %v2181, %v2860
    %v2862 = vpop.f32.mrb[0].mxu0
    %v2863 = vadd.f32 %v2177, %v2862
    %v2864 = vpop.f32.mrb[0].mxu0
    %v2865 = vadd.f32 %v2181, %v2864
    %2866 = vdwg.mxu0
    %2867 = vmatprep.subr.bf16.mxu0 %v2601
    %2868 = vmatpush1.bf16.msra.mxu0 %v2600
    %2869 = vmatprep.subr.bf16.mxu0 %v2603
    %2870 = vmatpush1.bf16.msra.mxu0 %v2602
    %2871 = vmatprep.subr.bf16.mxu0 %v2605
    %2872 = vmatpush1.bf16.msra.mxu0 %v2604
    %2873 = vmatprep.subr.bf16.mxu0 %v2607
    %2874 = vmatpush1.bf16.msra.mxu0 %v2606
    %2875 = vmatprep.subr.bf16.mxu0 %v2609
    %2876 = vmatpush1.bf16.msra.mxu0 %v2608
    %2877 = vmatprep.subr.bf16.mxu0 %v2611
    %2878 = vmatpush1.bf16.msra.mxu0 %v2610
    %2879 = vmatprep.subr.bf16.mxu0 %v2613
    %2880 = vmatpush1.bf16.msra.mxu0 %v2612
    %2881 = vmatprep.subr.bf16.mxu0 %v2615
    %2882 = vmatpush1.bf16.msra.mxu0 %v2614
    %2883 = vmatprep.subr.bf16.mxu0 %v2617
    %2884 = vmatpush1.bf16.msra.mxu0 %v2616
    %2885 = vmatprep.subr.bf16.mxu0 %v2619
    %2886 = vmatpush1.bf16.msra.mxu0 %v2618
    %2887 = vmatprep.subr.bf16.mxu0 %v2621
    %2888 = vmatpush1.bf16.msra.mxu0 %v2620
    %2889 = vmatprep.subr.bf16.mxu0 %v2623
    %2890 = vmatpush1.bf16.msra.mxu0 %v2622
    %2891 = vmatprep.subr.bf16.mxu0 %v2625
    %2892 = vmatpush1.bf16.msra.mxu0 %v2624
    %2893 = vmatprep.subr.bf16.mxu0 %v2627
    %2894 = vmatpush1.bf16.msra.mxu0 %v2626
    %2895 = vmatprep.subr.bf16.mxu0 %v2629
    %2896 = vmatpush1.bf16.msra.mxu0 %v2628
    %2897 = vmatprep.subr.bf16.mxu0 %v2631
    %2898 = vmatpush1.bf16.msra.mxu0 %v2630
    %2899 = vmatprep.mubr.bf16.mxu0 %v2039
    %2900 = vmatmul.mubr.bf16.gmra.mrb[0].mxu0 %v2038
    %v2901 = vpop.f32.mrb[0].mxu0
    %v2902 = vadd.f32 %v2859, %v2901
    %v2903 = vpop.f32.mrb[0].mxu0
    %v2904 = vadd.f32 %v2861, %v2903
    %v2905 = vpop.f32.mrb[0].mxu0
    %v2906 = vadd.f32 %v2863, %v2905
    %v2907 = vpop.f32.mrb[0].mxu0
    %v2908 = vadd.f32 %v2865, %v2907
    %2909 = vdwg.mxu0
    %2910 = vmatprep.subr.bf16.mxu0 %v2633
    %2911 = vmatpush1.bf16.msra.mxu0 %v2632
    %2912 = vmatprep.subr.bf16.mxu0 %v2635
    %2913 = vmatpush1.bf16.msra.mxu0 %v2634
    %2914 = vmatprep.subr.bf16.mxu0 %v2637
    %2915 = vmatpush1.bf16.msra.mxu0 %v2636
    %2916 = vmatprep.subr.bf16.mxu0 %v2639
    %2917 = vmatpush1.bf16.msra.mxu0 %v2638
    %2918 = vmatprep.subr.bf16.mxu0 %v2641
    %2919 = vmatpush1.bf16.msra.mxu0 %v2640
    %2920 = vmatprep.subr.bf16.mxu0 %v2643
    %2921 = vmatpush1.bf16.msra.mxu0 %v2642
    %2922 = vmatprep.subr.bf16.mxu0 %v2645
    %2923 = vmatpush1.bf16.msra.mxu0 %v2644
    %2924 = vmatprep.subr.bf16.mxu0 %v2647
    %2925 = vmatpush1.bf16.msra.mxu0 %v2646
    %2926 = vmatprep.subr.bf16.mxu0 %v2649
    %2927 = vmatpush1.bf16.msra.mxu0 %v2648
    %2928 = vmatprep.subr.bf16.mxu0 %v2651
    %2929 = vmatpush1.bf16.msra.mxu0 %v2650
    %2930 = vmatprep.subr.bf16.mxu0 %v2653
    %2931 = vmatpush1.bf16.msra.mxu0 %v2652
    %2932 = vmatprep.subr.bf16.mxu0 %v2655
    %2933 = vmatpush1.bf16.msra.mxu0 %v2654
    %2934 = vmatprep.subr.bf16.mxu0 %v2657
    %2935 = vmatpush1.bf16.msra.mxu0 %v2656
    %2936 = vmatprep.subr.bf16.mxu0 %v2659
    %2937 = vmatpush1.bf16.msra.mxu0 %v2658
    %2938 = vmatprep.subr.bf16.mxu0 %v2661
    %2939 = vmatpush1.bf16.msra.mxu0 %v2660
    %2940 = vmatprep.subr.bf16.mxu0 %v2663
    %2941 = vmatpush1.bf16.msra.mxu0 %v2662
    %2942 = vmatprep.mubr.bf16.mxu0 %v2041
    %2943 = vmatmul.mubr.bf16.gmra.mrb[0].mxu0 %v2040
    %v2944 = vpop.f32.mrb[0].mxu0
    %v2945 = vadd.f32 %v2902, %v2944
    %v2946 = vpop.f32.mrb[0].mxu0
    %v2947 = vadd.f32 %v2904, %v2946
    %v2948 = vpop.f32.mrb[0].mxu0
    %v2949 = vadd.f32 %v2906, %v2948
    %v2950 = vpop.f32.mrb[0].mxu0
    %v2951 = vadd.f32 %v2908, %v2950
    %2952 = vdwg.mxu0
    %2953 = vmatprep.subr.bf16.mxu0 %v2665
    %2954 = vmatpush1.bf16.msra.mxu0 %v2664
    %2955 = vmatprep.subr.bf16.mxu0 %v2667
    %2956 = vmatpush1.bf16.msra.mxu0 %v2666
    %2957 = vmatprep.subr.bf16.mxu0 %v2669
    %2958 = vmatpush1.bf16.msra.mxu0 %v2668
    %2959 = vmatprep.subr.bf16.mxu0 %v2671
    %2960 = vmatpush1.bf16.msra.mxu0 %v2670
    %2961 = vmatprep.subr.bf16.mxu0 %v2673
    %2962 = vmatpush1.bf16.msra.mxu0 %v2672
    %2963 = vmatprep.subr.bf16.mxu0 %v2675
    %2964 = vmatpush1.bf16.msra.mxu0 %v2674
    %2965 = vmatprep.subr.bf16.mxu0 %v2677
    %2966 = vmatpush1.bf16.msra.mxu0 %v2676
    %2967 = vmatprep.subr.bf16.mxu0 %v2679
    %2968 = vmatpush1.bf16.msra.mxu0 %v2678
    %2969 = vmatprep.subr.bf16.mxu0 %v2681
    %2970 = vmatpush1.bf16.msra.mxu0 %v2680
    %2971 = vmatprep.subr.bf16.mxu0 %v2683
    %2972 = vmatpush1.bf16.msra.mxu0 %v2682
    %2973 = vmatprep.subr.bf16.mxu0 %v2685
    %2974 = vmatpush1.bf16.msra.mxu0 %v2684
    %2975 = vmatprep.subr.bf16.mxu0 %v2687
    %2976 = vmatpush1.bf16.msra.mxu0 %v2686
    %2977 = vmatprep.subr.bf16.mxu0 %v2689
    %2978 = vmatpush1.bf16.msra.mxu0 %v2688
    %2979 = vmatprep.subr.bf16.mxu0 %v2691
    %2980 = vmatpush1.bf16.msra.mxu0 %v2690
    %2981 = vmatprep.subr.bf16.mxu0 %v2693
    %2982 = vmatpush1.bf16.msra.mxu0 %v2692
    %2983 = vmatprep.subr.bf16.mxu0 %v2695
    %2984 = vmatpush1.bf16.msra.mxu0 %v2694
    %2985 = vmatprep.mubr.bf16.mxu0 %v2043
    %2986 = vmatmul.mubr.bf16.gmra.mrb[0].mxu0 %v2042
    %v2987 = vpop.f32.mrb[0].mxu0
    %v2988 = vadd.f32 %v2945, %v2987
    %v2989 = vpop.f32.mrb[0].mxu0
    %v2990 = vadd.f32 %v2947, %v2989
    %v2991 = vpop.f32.mrb[0].mxu0
    %v2992 = vadd.f32 %v2949, %v2991
    %v2993 = vpop.f32.mrb[0].mxu0
    %v2994 = vadd.f32 %v2951, %v2993
    %2995 = vdwg.mxu0
    %2996 = vst [vmem:[#allocation10] sm:$0xff] %v2988
    %2997 = vst [vmem:[#allocation10 + $0x8] sm:$0xff] %v2990
    %2998 = vst [vmem:[#allocation10 + $0x10] sm:$0xff] %v2992
    %2999 = vst [vmem:[#allocation10 + $0x18] sm:$0xff] %v2994
    // Predicated region
    $region38: #{tpu_custom_call.1} parent=1 // pred_check
      _
    $region39: #{tpu_custom_call.1} parent=1 // pred_check_branch
      %3001 = sbr.rel (0) target = $region41
    $region40: #{tpu_custom_call.1} parent=1 // pred_region
      %s3003 = ssub.s32 512, 512
      %3004 = vsyncadd [#allocation4], %s3003
      %s3005 = sshll.u32 [#allocation10], 4
      %s3006 = int_to_ptr.vmem [resolvable:$true] %s3005
      %3011 = dma.vmem_to_hbm [thread:$0]  %s3006, 512, %s5, [#allocation4], 256, 256, 16
    $region41: #{tpu_custom_call.1} parent=1 // pred_fallthru
      _
    // Predicated region
    $region42: #{tpu_custom_call.1} parent=1 // pred_check
      _
    $region43: #{tpu_custom_call.1} parent=1 // pred_check_branch
      %3013 = sbr.rel (0) target = $region45
    $region44: #{tpu_custom_call.1} parent=1 // pred_region
      %3014 = dma.done [#allocation4], 512
    $region45: #{tpu_custom_call.1} parent=1 // pred_fallthru
      _
    %3015 = vsyncpa [#allocation3], 1
    %3016 = vsyncpa [#allocation6], 1
    %3017 = vsyncpa [#allocation9], 1
    %3018 = vsyncpa [#allocation4], 1

</llo_original>
